<compile_context>
chip_gen: v7x
topology: tpu7x:2x2x1
jax: 0.10.0
libtpu: 0.0.40
codegen_flags: <defaults>
</compile_context>

<pallas_src>
import functools

import numpy as np
import jax
import jax.numpy as jnp
from jax import lax
from jax.experimental import pallas as pl
from jax.experimental.pallas import tpu as pltpu


# ----------------------------------------------------------------------------
# Generation-aware VMEM budget & tile helpers
# ----------------------------------------------------------------------------
@functools.lru_cache(maxsize=None)
def _vmem_cap_bytes():
    """Physical per-core VMEM (128 MiB v5e/v6e, 64 MiB v7x); safe fallback."""
    try:
        return int(pltpu.get_tpu_info().vmem_capacity_bytes)
    except Exception:
        return 64 * 1024 * 1024


def _vmem_limit_bytes():
    # ~75% of physical VMEM, with headroom for Mosaic internal scratch.
    return min(int(0.75 * _vmem_cap_bytes()), 100 * 1024 * 1024)


def _default_decode_tiles():
    # Bigger lane-dense output tiles on 128-MiB-VMEM parts (v5e/v6e); capped
    # for v7x's 64 MiB so double-buffered z1/out tiles stay under budget.
    if _vmem_cap_bytes() >= 96 * 1024 * 1024:
        return 512, 1024
    return 512, 512


def _pick_tile(dim, target):
    """Largest multiple-of-128 divisor of `dim` <= target, else the full dim.

    Exact division keeps reduction-axis tiling correct (no padded garbage in
    the accumulators).
    # TODO(synk): pad ragged dims to a multiple of 128 host-side for better tiling.
    """
    dim, target = int(dim), int(target)
    if dim <= target:
        return dim
    if dim % target == 0:
        return target
    t = target - (target % 128)
    while t >= 128:
        if dim % t == 0:
            return t
        t -= 128
    return dim


def _nbytes(shape, dtype):
    return int(np.prod(shape)) * np.dtype(dtype).itemsize


# ----------------------------------------------------------------------------
# Pallas kernels
# ----------------------------------------------------------------------------
def _xw_kernel(x_ref, w_ref, o_ref):
    """One row-block of xw = X @ W_base."""
    o_ref[...] = jnp.dot(x_ref[...], w_ref[...],
                         preferred_element_type=jnp.float32).astype(o_ref.dtype)


def _hidden_head_kernel(adj_ref, xw_ref, wcat_ref, hw_ref, acc_ref, *,
                        adj_contract_dim0):
    """One (row-block, K-block) step of hw = relu(adj(.T) @ xw) @ W_cat.

    hidden lives only in the f32 VMEM accumulator; only hw (n_hidden x 2*h2)
    goes back to HBM.
    """
    k = pl.program_id(1)

    @pl.when(k == 0)
    def _():
        acc_ref[...] = jnp.zeros_like(acc_ref)

    if adj_contract_dim0:
        # adj.T @ xw without materializing adj.T: contract dim 0 of both.
        part = lax.dot_general(adj_ref[...], xw_ref[...],
                               (((0,), (0,)), ((), ())),
                               preferred_element_type=jnp.float32)
    else:
        part = jnp.dot(adj_ref[...], xw_ref[...],
                       preferred_element_type=jnp.float32)
    acc_ref[...] += part

    @pl.when(k == pl.num_programs(1) - 1)
    def _():
        hidden = jnp.maximum(acc_ref[...], 0.0)               # f32 VPU (v5e-safe)
        hw_ref[...] = jnp.dot(hidden.astype(wcat_ref.dtype), wcat_ref[...],
                              preferred_element_type=jnp.float32
                              ).astype(hw_ref.dtype)


def _head_reparam_kernel(adj_ref, hw_ref, *rest, h2, n_samples,
                         adj_contract_dim0):
    """One (row-block, K-block) step of cat = adj(.T) @ hw, then
    mean|logstd = split(cat) and z_k = noise_k * exp(logstd) + mean per draw.

    mean / logstd / std stay VMEM-resident; only the z's reach HBM.
    """
    noise_refs = rest[:n_samples]
    z_refs = rest[n_samples:2 * n_samples]
    acc_ref = rest[2 * n_samples]
    k = pl.program_id(1)

    @pl.when(k == 0)
    def _():
        acc_ref[...] = jnp.zeros_like(acc_ref)

    if adj_contract_dim0:
        part = lax.dot_general(adj_ref[...], hw_ref[...],
                               (((0,), (0,)), ((), ())),
                               preferred_element_type=jnp.float32)
    else:
        part = jnp.dot(adj_ref[...], hw_ref[...],
                       preferred_element_type=jnp.float32)
    acc_ref[...] += part

    @pl.when(k == pl.num_programs(1) - 1)
    def _():
        cat = acc_ref[...]
        # TODO(synk): at production size make h2 a multiple of 128 (256 on
        # v6e/v7x) so this split is a free lane-block view and the z stores
        # are unmasked lane-dense vst.
        mean = cat[:, :h2]
        std = jnp.exp(cat[:, h2:])                            # EUP, f32
        for noise_ref, z_ref in zip(noise_refs, z_refs):
            z_ref[...] = (noise_ref[...].astype(jnp.float32) * std + mean
                          ).astype(z_ref.dtype)


def _decode_kernel(z1_ref, z2_ref, sq1_ref, sq2_ref, o_ref, *, tn, z2_resident):
    """A[i, j] = exp(-0.5 * ||z1_i - z2_j||^2) for one (tm, tn) output tile.

    sq1 / sq2 are hoisted by the wrapper; the tile only does the cross-term
    matmul (no in-kernel transpose; latent dim contracted on both operands)
    plus the exp.
    """
    if z2_resident:
        # Z2 is one VMEM-resident slab shared across the whole grid.
        start = pl.multiple_of(pl.program_id(1) * tn, tn)
        z2_tile = z2_ref[pl.ds(start, tn), :]
    else:
        z2_tile = z2_ref[...]
    cross = lax.dot_general(z1_ref[...], z2_tile,
                            (((1,), (1,)), ((), ())),
                            preferred_element_type=jnp.float32)   # (tm, tn)
    d2 = jnp.maximum(sq1_ref[...] + sq2_ref[...] - 2.0 * cross, 0.0)
    o_ref[...] = jnp.exp(-0.5 * d2).astype(o_ref.dtype)


# ----------------------------------------------------------------------------
# Pallas wrappers
# ----------------------------------------------------------------------------
def gcn_xw(x, w, *, tr=256):
    """xw = x @ w, row-tiled (parallel) so both v7x TensorCores get work."""
    n, din = x.shape
    h1 = w.shape[1]
    tr = _pick_tile(n, tr)
    return pl.pallas_call(
        _xw_kernel,
        out_shape=jax.ShapeDtypeStruct((n, h1), x.dtype),
        grid=(n // tr,),
        in_specs=[pl.BlockSpec((tr, din), lambda i: (i, 0)),
                  pl.BlockSpec((din, h1), lambda i: (0, 0))],
        out_specs=pl.BlockSpec((tr, h1), lambda i: (i, 0)),
        compiler_params=pltpu.CompilerParams(
            dimension_semantics=("parallel",),
            vmem_limit_bytes=_vmem_limit_bytes()),
        cost_estimate=pl.CostEstimate(
            flops=2 * n * din * h1, transcendentals=0,
            bytes_accessed=_nbytes(x.shape, x.dtype) + _nbytes(w.shape, w.dtype)
            + _nbytes((n, h1), x.dtype)),
    )(x, w)


def gcn_hidden_head(adj, xw, w_cat, *, adj_contract_dim0, tr=256, tk=512):
    """hw = relu(adj(.T) @ xw) @ w_cat, tiled (rows parallel, K arbitrary)."""
    n1, n2 = adj.shape
    h1 = xw.shape[1]
    hcat = w_cat.shape[1]
    n_rows = n2 if adj_contract_dim0 else n1        # rows of hidden / hw
    n_contract = n1 if adj_contract_dim0 else n2    # reduction extent
    tr = _pick_tile(n_rows, tr)
    tk = _pick_tile(n_contract, tk)
    grid = (n_rows // tr, n_contract // tk)

    if adj_contract_dim0:
        adj_spec = pl.BlockSpec((tk, tr), lambda i, k: (k, i))
    else:
        adj_spec = pl.BlockSpec((tr, tk), lambda i, k: (i, k))

    flops = 2 * n1 * n2 * h1 + 2 * n_rows * h1 * hcat
    bytes_accessed = (_nbytes(adj.shape, adj.dtype) + _nbytes(xw.shape, xw.dtype)
                      + _nbytes(w_cat.shape, w_cat.dtype)
                      + _nbytes((n_rows, hcat), xw.dtype))

    return pl.pallas_call(
        functools.partial(_hidden_head_kernel,
                          adj_contract_dim0=adj_contract_dim0),
        out_shape=jax.ShapeDtypeStruct((n_rows, hcat), xw.dtype),
        grid=grid,
        in_specs=[adj_spec,
                  pl.BlockSpec((tk, h1), lambda i, k: (k, 0)),
                  pl.BlockSpec((h1, hcat), lambda i, k: (0, 0))],
        out_specs=pl.BlockSpec((tr, hcat), lambda i, k: (i, 0)),
        scratch_shapes=[pltpu.VMEM((tr, h1), jnp.float32)],
        compiler_params=pltpu.CompilerParams(
            dimension_semantics=("parallel", "arbitrary"),
            vmem_limit_bytes=_vmem_limit_bytes()),
        cost_estimate=pl.CostEstimate(flops=flops, transcendentals=0,
                                      bytes_accessed=bytes_accessed),
    )(adj, xw, w_cat)


def gcn_head_reparam(adj, hw, noises, *, adj_contract_dim0, tr=256, tk=512):
    """cat = adj(.T) @ hw; split into mean|logstd; one z per noise draw.

    mean/logstd are computed once; multiple noise draws reuse them (Z1 & Z1b).
    """
    n1, n2 = adj.shape
    hcat = hw.shape[1]
    h2 = hcat // 2
    n_out = n2 if adj_contract_dim0 else n1
    n_contract = n1 if adj_contract_dim0 else n2
    n_samples = len(noises)
    tr = _pick_tile(n_out, tr)
    tk = _pick_tile(n_contract, tk)
    grid = (n_out // tr, n_contract // tk)

    if adj_contract_dim0:
        adj_spec = pl.BlockSpec((tk, tr), lambda i, k: (k, i))
    else:
        adj_spec = pl.BlockSpec((tr, tk), lambda i, k: (i, k))

    noise_specs = [pl.BlockSpec((tr, h2), lambda i, k: (i, 0)) for _ in noises]
    z_specs = [pl.BlockSpec((tr, h2), lambda i, k: (i, 0)) for _ in noises]
    out_shape = tuple(jax.ShapeDtypeStruct((n_out, h2), hw.dtype)
                      for _ in range(n_samples))

    flops = 2 * n1 * n2 * hcat + 3 * n_samples * n_out * h2
    bytes_accessed = (_nbytes(adj.shape, adj.dtype) + _nbytes(hw.shape, hw.dtype)
                      + sum(_nbytes(nz.shape, nz.dtype) for nz in noises)
                      + n_samples * _nbytes((n_out, h2), hw.dtype))

    return pl.pallas_call(
        functools.partial(_head_reparam_kernel, h2=h2, n_samples=n_samples,
                          adj_contract_dim0=adj_contract_dim0),
        out_shape=out_shape,
        grid=grid,
        in_specs=[adj_spec,
                  pl.BlockSpec((tk, hcat), lambda i, k: (k, 0))] + noise_specs,
        out_specs=z_specs,
        scratch_shapes=[pltpu.VMEM((tr, hcat), jnp.float32)],
        compiler_params=pltpu.CompilerParams(
            dimension_semantics=("parallel", "arbitrary"),
            vmem_limit_bytes=_vmem_limit_bytes()),
        cost_estimate=pl.CostEstimate(flops=flops,
                                      transcendentals=n_out * h2,
                                      bytes_accessed=bytes_accessed),
    )(adj, hw, *noises)


def distance_decode(z1, z2, sq1, sq2, *, out_dtype=None, tm=None, tn=None):
    """exp(-0.5 * cdist(z1, z2)^2), tiled over (tm, tn) output blocks.

    sq1 (m, 1) and sq2 (1, n) are hoisted by the caller (sq2/sq1 shared by both
    decode calls).  Z2 is kept fully VMEM-resident across the grid when it fits.
    Pass out_dtype=jnp.bfloat16 at scale to halve the write-bound A_pred
    writeback (the demo keeps the input dtype for the exact check).
    """
    m, d = z1.shape
    n = z2.shape[0]
    if out_dtype is None:
        out_dtype = z1.dtype
    dtm, dtn = _default_decode_tiles()
    tm = _pick_tile(m, tm if tm is not None else dtm)
    tn = _pick_tile(n, tn if tn is not None else dtn)
    grid = (m // tm, n // tn)

    # Z2 resident once in VMEM (constant block index => single DMA) instead of
    # (m/tm) full re-reads; fall back to per-tile streaming if it's huge.
    z2_resident = _nbytes(z2.shape, z2.dtype) <= _vmem_limit_bytes() // 4
    if z2_resident:
        z2_spec = pl.BlockSpec((n, d), lambda i, j: (0, 0))
    else:
        z2_spec = pl.BlockSpec((tn, d), lambda i, j: (j, 0))

    flops = 2 * m * n * d + 6 * m * n
    bytes_accessed = (_nbytes(z1.shape, z1.dtype) + _nbytes(z2.shape, z2.dtype)
                      + _nbytes(sq1.shape, sq1.dtype)
                      + _nbytes(sq2.shape, sq2.dtype)
                      + _nbytes((m, n), out_dtype))

    return pl.pallas_call(
        functools.partial(_decode_kernel, tn=tn, z2_resident=z2_resident),
        out_shape=jax.ShapeDtypeStruct((m, n), out_dtype),
        grid=grid,
        in_specs=[
            pl.BlockSpec((tm, d), lambda i, j: (i, 0)),    # Z1 row tile
            z2_spec,                                       # Z2 (resident slab)
            pl.BlockSpec((tm, 1), lambda i, j: (i, 0)),    # hoisted ||z1||^2
            pl.BlockSpec((1, tn), lambda i, j: (0, j)),    # hoisted ||z2||^2
        ],
        out_specs=pl.BlockSpec((tm, tn), lambda i, j: (i, j)),
        compiler_params=pltpu.CompilerParams(
            dimension_semantics=("parallel", "parallel"),
            vmem_limit_bytes=_vmem_limit_bytes()),
        cost_estimate=pl.CostEstimate(flops=flops, transcendentals=m * n,
                                      bytes_accessed=bytes_accessed),
    )(z1, z2, sq1, sq2)


# ----------------------------------------------------------------------------
# VBGAE2 forward (glue in plain JAX, compute in the kernels above)
# ----------------------------------------------------------------------------
def glorot_init(key, input_dim, output_dim):
    init_range = np.sqrt(6.0 / (input_dim + output_dim))
    return jax.random.uniform(
        key, (input_dim, output_dim), jnp.float32, -init_range, init_range)


def make_params(key, input_dim1, hidden1_dim1, hidden2_dim1,
                input_dim2, hidden1_dim2, hidden2_dim2):
    ks = jax.random.split(key, 6)
    p = dict(
        w_base1=glorot_init(ks[0], input_dim1, hidden1_dim1),
        w_mean1=glorot_init(ks[1], hidden1_dim1, hidden2_dim1),
        w_logstd1=glorot_init(ks[2], hidden1_dim1, hidden2_dim1),
        w_base2=glorot_init(ks[3], input_dim2, hidden1_dim2),
        w_mean2=glorot_init(ks[4], hidden1_dim2, hidden2_dim2),
        w_logstd2=glorot_init(ks[5], hidden1_dim2, hidden2_dim2),
    )
    # Fused head weights: one (h1, 2*h2) matmul replaces the separate mean /
    # logstd head matmuls inside the stage-B / stage-C kernels.
    p["w_cat1"] = jnp.concatenate([p["w_mean1"], p["w_logstd1"]], axis=1)
    p["w_cat2"] = jnp.concatenate([p["w_mean2"], p["w_logstd2"]], axis=1)
    return p


def vbgae2_forward(params, adj, X1, X2, noise1a, noise2, noise1b, species_idx):
    # Side 1: hidden1 = relu(adj.T @ (X1 @ Wb1)); [mean1|logstd1] = adj @ (hidden1 @ Wcat1).
    # mean1/logstd1 are deterministic -> computed ONCE, reparameterized twice
    # (Z1 with noise1a, Z1b with noise1b; encode3 of the original recomputes encode1).
    xw1 = gcn_xw(X1, params["w_base1"])
    hw1 = gcn_hidden_head(adj, xw1, params["w_cat1"], adj_contract_dim0=True)
    Z1, Z1b = gcn_head_reparam(adj, hw1, (noise1a, noise1b),
                               adj_contract_dim0=False)

    # Side 2: hidden2 = relu(adj @ (X2 @ Wb2)); [mean2|logstd2] = adj.T @ (hidden2 @ Wcat2).
    xw2 = gcn_xw(X2, params["w_base2"])
    hw2 = gcn_hidden_head(adj, xw2, params["w_cat2"], adj_contract_dim0=False)
    (Z2,) = gcn_head_reparam(adj, hw2, (noise2,), adj_contract_dim0=True)

    # Species gather (one row per species group; indices precomputed on host).
    # TODO(synk): fuse this gather into the second decode via
    # PrefetchScalarGridSpec + pl.Element row indexing instead of materializing Z3.
    Z3 = Z1b[species_idx, :]

    # Squared norms hoisted once; sq2 shared by both decodes, sq3 gathered from sq1.
    z1f = Z1.astype(jnp.float32)
    z2f = Z2.astype(jnp.float32)
    sq1 = jnp.sum(z1f * z1f, axis=-1, keepdims=True)        # (N1, 1)
    sq2 = jnp.sum(z2f * z2f, axis=-1)[None, :]              # (1, N2)
    sq3 = sq1[species_idx, :]

    A_pred = distance_decode(Z1, Z2, sq1, sq2)
    A_pred2 = distance_decode(Z3, Z2, sq3, sq2)
    return A_pred, A_pred2, Z1, Z2, Z3


# ----------------------------------------------------------------------------
# Demo / smoke test
# ----------------------------------------------------------------------------
if __name__ == "__main__":
    # Small shapes consistent with the module's forward.  (At real sizes make
    # h1 / h2 multiples of 128 — 256 on v6e/v7x — for lane-dense stores and a
    # full MXU.)
    N1, N2 = 16, 8                 # rows of X1 / X2; adj is (N1, N2)
    input_dim1, hidden1_dim1, hidden2_dim1 = 8, 16, 8
    input_dim2, hidden1_dim2, hidden2_dim2 = 8, 16, 8   # latent dims must match

    root = jax.random.PRNGKey(0)
    k_adj, k_x1, k_x2, k_p, k_n1a, k_n2, k_n1b = jax.random.split(root, 7)

    adj = (jax.random.uniform(k_adj, (N1, N2)) > 0.5).astype(jnp.float32)
    X1 = jax.random.normal(k_x1, (N1, input_dim1), jnp.float32)
    X2 = jax.random.normal(k_x2, (N2, input_dim2), jnp.float32)

    params = make_params(k_p, input_dim1, hidden1_dim1, hidden2_dim1,
                         input_dim2, hidden1_dim2, hidden2_dim2)

    noise1a = jax.random.normal(k_n1a, (N1, hidden2_dim1), jnp.float32)
    noise2 = jax.random.normal(k_n2, (N2, hidden2_dim2), jnp.float32)
    noise1b = jax.random.normal(k_n1b, (N1, hidden2_dim1), jnp.float32)

    # species: one label per row of X1; pick one row per species group
    # (pandas groupby(...).sample(1) equivalent, deterministic seed).
    species = np.array([0, 0, 1, 1, 2, 2, 3, 3, 0, 1, 2, 3, 0, 1, 2, 3])
    rng = np.random.default_rng(0)
    species_idx = jnp.asarray(np.array(
        [rng.choice(np.flatnonzero(species == s)) for s in np.unique(species)],
        dtype=np.int32))

    fwd = jax.jit(vbgae2_forward)
    A_pred, A_pred2, Z1, Z2, Z3 = fwd(
        params, adj, X1, X2, noise1a, noise2, noise1b, species_idx)
    jax.block_until_ready((A_pred, A_pred2, Z1, Z2, Z3))

    # ---- exact check against a plain-JAX reference (f32 path) ----
    def ref_gcn(x, w, a, relu):
        h = a @ (x @ w)
        return jnp.maximum(h, 0.0) if relu else h

    h1r = ref_gcn(X1, params["w_base1"], adj.T, True)
    m1 = ref_gcn(h1r, params["w_mean1"], adj, False)
    s1 = ref_gcn(h1r, params["w_logstd1"], adj, False)
    Z1_ref = noise1a * jnp.exp(s1) + m1
    h2r = ref_gcn(X2, params["w_base2"], adj, True)
    m2 = ref_gcn(h2r, params["w_mean2"], adj.T, False)
    s2 = ref_gcn(h2r, params["w_logstd2"], adj.T, False)
    Z2_ref = noise2 * jnp.exp(s2) + m2
    Z1b_ref = noise1b * jnp.exp(s1) + m1
    Z3_ref = Z1b_ref[species_idx, :]
    dfun = lambda a, b: jnp.exp(
        -0.5 * (jnp.sum(a * a, -1)[:, None] + jnp.sum(b * b, -1)[None, :]
                - 2.0 * a @ b.T))
    np.testing.assert_allclose(np.asarray(Z1), np.asarray(Z1_ref), rtol=1e-4, atol=1e-4)
    np.testing.assert_allclose(np.asarray(Z2), np.asarray(Z2_ref), rtol=1e-4, atol=1e-4)
    np.testing.assert_allclose(np.asarray(Z3), np.asarray(Z3_ref), rtol=1e-4, atol=1e-4)
    np.testing.assert_allclose(np.asarray(A_pred), np.asarray(dfun(Z1_ref, Z2_ref)),
                               rtol=1e-4, atol=1e-4)
    np.testing.assert_allclose(np.asarray(A_pred2), np.asarray(dfun(Z3_ref, Z2_ref)),
                               rtol=1e-4, atol=1e-4)

    # ---- bf16-in-HBM smoke run (the at-scale configuration from the review):
    #      adj is 0/1 so bf16 storage is exact; activations/weights lose a few
    #      mantissa bits, so only shape / finiteness / range are checked here.
    bf = jnp.bfloat16
    params_bf = {k: params[k].astype(bf)
                 for k in ("w_base1", "w_cat1", "w_base2", "w_cat2")}
    out_bf = fwd(params_bf, adj.astype(bf), X1.astype(bf), X2.astype(bf),
                 noise1a.astype(bf), noise2.astype(bf), noise1b.astype(bf),
                 species_idx)
    jax.block_until_ready(out_bf)
    A_bf = out_bf[0].astype(jnp.float32)
    A2_bf = out_bf[1].astype(jnp.float32)
    assert A_bf.shape == (N1, N2)
    assert A2_bf.shape == (int(species_idx.shape[0]), N2)
    for arr in out_bf:
        assert bool(jnp.isfinite(arr.astype(jnp.float32)).all())
    assert bool((A_bf >= 0.0).all()) and bool((A_bf <= 1.0 + 1e-3).all())
    assert bool((A2_bf >= 0.0).all()) and bool((A2_bf <= 1.0 + 1e-3).all())

    print("KERNEL_OK")
</pallas_src>

<mosaic_0001>
module attributes {stable_mosaic.version = 11 : i64} {
  func.func @_head_reparam_kernel(%arg0: i32, %arg1: i32, %arg2: memref<16x8xf32, #tpu.memory_space<vmem>>, %arg3: memref<8x16xf32, #tpu.memory_space<vmem>>, %arg4: memref<16x8xf32, #tpu.memory_space<vmem>>, %arg5: memref<16x8xf32, #tpu.memory_space<vmem>>, %arg6: memref<16x8xf32, #tpu.memory_space<vmem>>, %arg7: memref<16x8xf32, #tpu.memory_space<vmem>>, %arg8: memref<16x16xf32, #tpu.memory_space<vmem>>) attributes {dimension_semantics = [#tpu.dimension_semantics<parallel>, #tpu.dimension_semantics<arbitrary>], iteration_bounds = array<i64: 1, 1>, scalar_prefetch = 0 : i64, scratch_operands = 1 : i64, tpu.core_type = #tpu.core_type<tc>, window_params = [{transform_indices = @transform_0, window_bounds = array<i64: 16, 8>}, {transform_indices = @transform_1, window_bounds = array<i64: 8, 16>}, {transform_indices = @transform_2, window_bounds = array<i64: 16, 8>}, {transform_indices = @transform_3, window_bounds = array<i64: 16, 8>}, {transform_indices = @transform_4, window_bounds = array<i64: 16, 8>}, {transform_indices = @transform_5, window_bounds = array<i64: 16, 8>}]} {
    %c0_i32 = arith.constant 0 : i32
    %0 = arith.cmpi eq, %arg1, %c0_i32 : i32
    %1 = arith.extui %0 : i1 to i32
    %c0_i32_0 = arith.constant 0 : i32
    %2 = arith.cmpi ne, %1, %c0_i32_0 : i32
    scf.if %2 {
      %cst_10 = arith.constant 0.000000e+00 : f32
      %12 = vector.broadcast %cst_10 : f32 to vector<16x16xf32>
      %c0_11 = arith.constant 0 : index
      %c0_12 = arith.constant 0 : index
      %13 = vector.load %arg8[%c0_11, %c0_12] : memref<16x16xf32, #tpu.memory_space<vmem>>, vector<16x16xf32>
      tpu.vector_store %arg8[%c0_11, %c0_12], %12 {strides = array<i32>} : memref<16x16xf32, #tpu.memory_space<vmem>>, vector<16x16xf32>,
    } else {
    }
    %c0 = arith.constant 0 : index
    %c0_1 = arith.constant 0 : index
    %3 = vector.load %arg2[%c0, %c0_1] : memref<16x8xf32, #tpu.memory_space<vmem>>, vector<16x8xf32>
    %c0_2 = arith.constant 0 : index
    %c0_3 = arith.constant 0 : index
    %4 = vector.load %arg3[%c0_2, %c0_3] : memref<8x16xf32, #tpu.memory_space<vmem>>, vector<8x16xf32>
    %cst = arith.constant dense<0.000000e+00> : vector<16x16xf32>
    %5 = tpu.matmul %3, %4, %cst {dimension_numbers = #tpu.dot_dimension_numbers<[1], [0], [0], [1], [0, 0, 1, 1], [], []>} : vector<16x8xf32>, vector<8x16xf32>, vector<16x16xf32> -> vector<16x16xf32>
    %c0_4 = arith.constant 0 : index
    %c0_5 = arith.constant 0 : index
    %6 = vector.load %arg8[%c0_4, %c0_5] : memref<16x16xf32, #tpu.memory_space<vmem>>, vector<16x16xf32>
    %7 = arith.addf %6, %5 : vector<16x16xf32>
    %c0_6 = arith.constant 0 : index
    %c0_7 = arith.constant 0 : index
    %8 = vector.load %arg8[%c0_6, %c0_7] : memref<16x16xf32, #tpu.memory_space<vmem>>, vector<16x16xf32>
    tpu.vector_store %arg8[%c0_6, %c0_7], %7 {strides = array<i32>} : memref<16x16xf32, #tpu.memory_space<vmem>>, vector<16x16xf32>,
    %c0_i32_8 = arith.constant 0 : i32
    %9 = arith.cmpi eq, %arg1, %c0_i32_8 : i32
    %10 = arith.extui %9 : i1 to i32
    %c0_i32_9 = arith.constant 0 : i32
    %11 = arith.cmpi ne, %10, %c0_i32_9 : i32
    scf.if %11 {
      %c0_10 = arith.constant 0 : index
      %c0_11 = arith.constant 0 : index
      %12 = vector.load %arg8[%c0_10, %c0_11] : memref<16x16xf32, #tpu.memory_space<vmem>>, vector<16x16xf32>
      %13 = vector.extract_strided_slice %12 {offsets = [0, 0], sizes = [16, 8], strides = [1, 1]} : vector<16x16xf32> to vector<16x8xf32>
      %14 = vector.extract_strided_slice %12 {offsets = [0, 8], sizes = [16, 8], strides = [1, 1]} : vector<16x16xf32> to vector<16x8xf32>
      %15 = math.exp %14 : vector<16x8xf32>
      %c0_12 = arith.constant 0 : index
      %c0_13 = arith.constant 0 : index
      %16 = vector.load %arg4[%c0_12, %c0_13] : memref<16x8xf32, #tpu.memory_space<vmem>>, vector<16x8xf32>
      %17 = arith.mulf %16, %15 : vector<16x8xf32>
      %18 = arith.addf %17, %13 : vector<16x8xf32>
      %c0_14 = arith.constant 0 : index
      %c0_15 = arith.constant 0 : index
      %19 = vector.load %arg6[%c0_14, %c0_15] : memref<16x8xf32, #tpu.memory_space<vmem>>, vector<16x8xf32>
      tpu.vector_store %arg6[%c0_14, %c0_15], %18 {strides = array<i32>} : memref<16x8xf32, #tpu.memory_space<vmem>>, vector<16x8xf32>,
      %c0_16 = arith.constant 0 : index
      %c0_17 = arith.constant 0 : index
      %20 = vector.load %arg5[%c0_16, %c0_17] : memref<16x8xf32, #tpu.memory_space<vmem>>, vector<16x8xf32>
      %21 = arith.mulf %20, %15 : vector<16x8xf32>
      %22 = arith.addf %21, %13 : vector<16x8xf32>
      %c0_18 = arith.constant 0 : index
      %c0_19 = arith.constant 0 : index
      %23 = vector.load %arg7[%c0_18, %c0_19] : memref<16x8xf32, #tpu.memory_space<vmem>>, vector<16x8xf32>
      tpu.vector_store %arg7[%c0_18, %c0_19], %22 {strides = array<i32>} : memref<16x8xf32, #tpu.memory_space<vmem>>, vector<16x8xf32>,
    } else {
    }
    return
  }
  func.func @transform_0(%arg0: i32, %arg1: i32) -> (i32, i32) {
    %c0_i32 = arith.constant 0 : i32
    return %arg0, %arg1 : i32, i32
  }
  func.func @transform_1(%arg0: i32, %arg1: i32) -> (i32, i32) {
    %c0_i32 = arith.constant 0 : i32
    %c0_i32_0 = arith.constant 0 : i32
    return %arg1, %c0_i32 : i32, i32
  }
  func.func @transform_2(%arg0: i32, %arg1: i32) -> (i32, i32) {
    %c0_i32 = arith.constant 0 : i32
    %c0_i32_0 = arith.constant 0 : i32
    return %arg0, %c0_i32 : i32, i32
  }
  func.func @transform_3(%arg0: i32, %arg1: i32) -> (i32, i32) {
    %c0_i32 = arith.constant 0 : i32
    %c0_i32_0 = arith.constant 0 : i32
    return %arg0, %c0_i32 : i32, i32
  }
  func.func @transform_4(%arg0: i32, %arg1: i32) -> (i32, i32) {
    %c0_i32 = arith.constant 0 : i32
    %c0_i32_0 = arith.constant 0 : i32
    return %arg0, %c0_i32 : i32, i32
  }
  func.func @transform_5(%arg0: i32, %arg1: i32) -> (i32, i32) {
    %c0_i32 = arith.constant 0 : i32
    %c0_i32_0 = arith.constant 0 : i32
    return %arg0, %c0_i32 : i32, i32
  }
}

module attributes {stable_mosaic.version = 11 : i64} {
  func.func @_xw_kernel(%arg0: i32, %arg1: memref<16x8xf32, #tpu.memory_space<vmem>>, %arg2: memref<8x16xf32, #tpu.memory_space<vmem>>, %arg3: memref<16x16xf32, #tpu.memory_space<vmem>>) attributes {dimension_semantics = [#tpu.dimension_semantics<parallel>], iteration_bounds = array<i64: 1>, scalar_prefetch = 0 : i64, scratch_operands = 0 : i64, tpu.core_type = #tpu.core_type<tc>, window_params = [{transform_indices = @transform_0, window_bounds = array<i64: 16, 8>}, {pipeline_mode = #tpu.pipeline_mode<synchronous>, transform_indices = @transform_1, window_bounds = array<i64: 8, 16>}, {transform_indices = @transform_2, window_bounds = array<i64: 16, 16>}]} {
    %c0 = arith.constant 0 : index
    %c0_0 = arith.constant 0 : index
    %0 = vector.load %arg1[%c0, %c0_0] : memref<16x8xf32, #tpu.memory_space<vmem>>, vector<16x8xf32>
    %c0_1 = arith.constant 0 : index
    %c0_2 = arith.constant 0 : index
    %1 = vector.load %arg2[%c0_1, %c0_2] : memref<8x16xf32, #tpu.memory_space<vmem>>, vector<8x16xf32>
    %cst = arith.constant dense<0.000000e+00> : vector<16x16xf32>
    %2 = tpu.matmul %0, %1, %cst {dimension_numbers = #tpu.dot_dimension_numbers<[1], [0], [0], [1], [0, 0, 1, 1], [], []>} : vector<16x8xf32>, vector<8x16xf32>, vector<16x16xf32> -> vector<16x16xf32>
    %c0_3 = arith.constant 0 : index
    %c0_4 = arith.constant 0 : index
    %3 = vector.load %arg3[%c0_3, %c0_4] : memref<16x16xf32, #tpu.memory_space<vmem>>, vector<16x16xf32>
    tpu.vector_store %arg3[%c0_3, %c0_4], %2 {strides = array<i32>} : memref<16x16xf32, #tpu.memory_space<vmem>>, vector<16x16xf32>,
    return
  }
  func.func @transform_0(%arg0: i32) -> (i32, i32) {
    %c0_i32 = arith.constant 0 : i32
    %c0_i32_0 = arith.constant 0 : i32
    return %arg0, %c0_i32 : i32, i32
  }
  func.func @transform_1(%arg0: i32) -> (i32, i32) {
    %c0_i32 = arith.constant 0 : i32
    %c0_i32_0 = arith.constant 0 : i32
    %c0_i32_1 = arith.constant 0 : i32
    return %c0_i32, %c0_i32_0 : i32, i32
  }
  func.func @transform_2(%arg0: i32) -> (i32, i32) {
    %c0_i32 = arith.constant 0 : i32
    %c0_i32_0 = arith.constant 0 : i32
    return %arg0, %c0_i32 : i32, i32
  }
}

module attributes {stable_mosaic.version = 11 : i64} {
  func.func @_hidden_head_kernel(%arg0: i32, %arg1: i32, %arg2: memref<16x8xf32, #tpu.memory_space<vmem>>, %arg3: memref<16x16xf32, #tpu.memory_space<vmem>>, %arg4: memref<16x16xf32, #tpu.memory_space<vmem>>, %arg5: memref<8x16xf32, #tpu.memory_space<vmem>>, %arg6: memref<8x16xf32, #tpu.memory_space<vmem>>) attributes {dimension_semantics = [#tpu.dimension_semantics<parallel>, #tpu.dimension_semantics<arbitrary>], iteration_bounds = array<i64: 1, 1>, scalar_prefetch = 0 : i64, scratch_operands = 1 : i64, tpu.core_type = #tpu.core_type<tc>, window_params = [{transform_indices = @transform_0, window_bounds = array<i64: 16, 8>}, {transform_indices = @transform_1, window_bounds = array<i64: 16, 16>}, {pipeline_mode = #tpu.pipeline_mode<synchronous>, transform_indices = @transform_2, window_bounds = array<i64: 16, 16>}, {transform_indices = @transform_3, window_bounds = array<i64: 8, 16>}]} {
    %c0_i32 = arith.constant 0 : i32
    %0 = arith.cmpi eq, %arg1, %c0_i32 : i32
    %1 = arith.extui %0 : i1 to i32
    %c0_i32_0 = arith.constant 0 : i32
    %2 = arith.cmpi ne, %1, %c0_i32_0 : i32
    scf.if %2 {
      %cst_10 = arith.constant 0.000000e+00 : f32
      %12 = vector.broadcast %cst_10 : f32 to vector<8x16xf32>
      %c0_11 = arith.constant 0 : index
      %c0_12 = arith.constant 0 : index
      %13 = vector.load %arg6[%c0_11, %c0_12] : memref<8x16xf32, #tpu.memory_space<vmem>>, vector<8x16xf32>
      tpu.vector_store %arg6[%c0_11, %c0_12], %12 {strides = array<i32>} : memref<8x16xf32, #tpu.memory_space<vmem>>, vector<8x16xf32>,
    } else {
    }
    %c0 = arith.constant 0 : index
    %c0_1 = arith.constant 0 : index
    %3 = vector.load %arg2[%c0, %c0_1] : memref<16x8xf32, #tpu.memory_space<vmem>>, vector<16x8xf32>
    %c0_2 = arith.constant 0 : index
    %c0_3 = arith.constant 0 : index
    %4 = vector.load %arg3[%c0_2, %c0_3] : memref<16x16xf32, #tpu.memory_space<vmem>>, vector<16x16xf32>
    %cst = arith.constant dense<0.000000e+00> : vector<8x16xf32>
    %5 = tpu.matmul %3, %4, %cst {dimension_numbers = #tpu.dot_dimension_numbers<[0], [0], [1], [1], [0, 1, 1, 1], [], []>} : vector<16x8xf32>, vector<16x16xf32>, vector<8x16xf32> -> vector<8x16xf32>
    %c0_4 = arith.constant 0 : index
    %c0_5 = arith.constant 0 : index
    %6 = vector.load %arg6[%c0_4, %c0_5] : memref<8x16xf32, #tpu.memory_space<vmem>>, vector<8x16xf32>
    %7 = arith.addf %6, %5 : vector<8x16xf32>
    %c0_6 = arith.constant 0 : index
    %c0_7 = arith.constant 0 : index
    %8 = vector.load %arg6[%c0_6, %c0_7] : memref<8x16xf32, #tpu.memory_space<vmem>>, vector<8x16xf32>
    tpu.vector_store %arg6[%c0_6, %c0_7], %7 {strides = array<i32>} : memref<8x16xf32, #tpu.memory_space<vmem>>, vector<8x16xf32>,
    %c0_i32_8 = arith.constant 0 : i32
    %9 = arith.cmpi eq, %arg1, %c0_i32_8 : i32
    %10 = arith.extui %9 : i1 to i32
    %c0_i32_9 = arith.constant 0 : i32
    %11 = arith.cmpi ne, %10, %c0_i32_9 : i32
    scf.if %11 {
      %c0_10 = arith.constant 0 : index
      %c0_11 = arith.constant 0 : index
      %12 = vector.load %arg6[%c0_10, %c0_11] : memref<8x16xf32, #tpu.memory_space<vmem>>, vector<8x16xf32>
      %cst_12 = arith.constant 0.000000e+00 : f32
      %13 = vector.broadcast %cst_12 : f32 to vector<8x16xf32>
      %14 = arith.maximumf %12, %13 : vector<8x16xf32>
      %c0_13 = arith.constant 0 : index
      %c0_14 = arith.constant 0 : index
      %15 = vector.load %arg4[%c0_13, %c0_14] : memref<16x16xf32, #tpu.memory_space<vmem>>, vector<16x16xf32>
      %cst_15 = arith.constant dense<0.000000e+00> : vector<8x16xf32>
      %16 = tpu.matmul %14, %15, %cst_15 {dimension_numbers = #tpu.dot_dimension_numbers<[1], [0], [0], [1], [0, 0, 1, 1], [], []>} : vector<8x16xf32>, vector<16x16xf32>, vector<8x16xf32> -> vector<8x16xf32>
      %c0_16 = arith.constant 0 : index
      %c0_17 = arith.constant 0 : index
      %17 = vector.load %arg5[%c0_16, %c0_17] : memref<8x16xf32, #tpu.memory_space<vmem>>, vector<8x16xf32>
      tpu.vector_store %arg5[%c0_16, %c0_17], %16 {strides = array<i32>} : memref<8x16xf32, #tpu.memory_space<vmem>>, vector<8x16xf32>,
    } else {
    }
    return
  }
  func.func @transform_0(%arg0: i32, %arg1: i32) -> (i32, i32) {
    %c0_i32 = arith.constant 0 : i32
    return %arg1, %arg0 : i32, i32
  }
  func.func @transform_1(%arg0: i32, %arg1: i32) -> (i32, i32) {
    %c0_i32 = arith.constant 0 : i32
    %c0_i32_0 = arith.constant 0 : i32
    return %arg1, %c0_i32 : i32, i32
  }
  func.func @transform_2(%arg0: i32, %arg1: i32) -> (i32, i32) {
    %c0_i32 = arith.constant 0 : i32
    %c0_i32_0 = arith.constant 0 : i32
    %c0_i32_1 = arith.constant 0 : i32
    return %c0_i32, %c0_i32_0 : i32, i32
  }
  func.func @transform_3(%arg0: i32, %arg1: i32) -> (i32, i32) {
    %c0_i32 = arith.constant 0 : i32
    %c0_i32_0 = arith.constant 0 : i32
    return %arg0, %c0_i32 : i32, i32
  }
}

module attributes {stable_mosaic.version = 11 : i64} {
  func.func @_hidden_head_kernel(%arg0: i32, %arg1: i32, %arg2: memref<16x8xf32, #tpu.memory_space<vmem>>, %arg3: memref<8x16xf32, #tpu.memory_space<vmem>>, %arg4: memref<16x16xf32, #tpu.memory_space<vmem>>, %arg5: memref<16x16xf32, #tpu.memory_space<vmem>>, %arg6: memref<16x16xf32, #tpu.memory_space<vmem>>) attributes {dimension_semantics = [#tpu.dimension_semantics<parallel>, #tpu.dimension_semantics<arbitrary>], iteration_bounds = array<i64: 1, 1>, scalar_prefetch = 0 : i64, scratch_operands = 1 : i64, tpu.core_type = #tpu.core_type<tc>, window_params = [{transform_indices = @transform_0, window_bounds = array<i64: 16, 8>}, {transform_indices = @transform_1, window_bounds = array<i64: 8, 16>}, {pipeline_mode = #tpu.pipeline_mode<synchronous>, transform_indices = @transform_2, window_bounds = array<i64: 16, 16>}, {transform_indices = @transform_3, window_bounds = array<i64: 16, 16>}]} {
    %c0_i32 = arith.constant 0 : i32
    %0 = arith.cmpi eq, %arg1, %c0_i32 : i32
    %1 = arith.extui %0 : i1 to i32
    %c0_i32_0 = arith.constant 0 : i32
    %2 = arith.cmpi ne, %1, %c0_i32_0 : i32
    scf.if %2 {
      %cst_10 = arith.constant 0.000000e+00 : f32
      %12 = vector.broadcast %cst_10 : f32 to vector<16x16xf32>
      %c0_11 = arith.constant 0 : index
      %c0_12 = arith.constant 0 : index
      %13 = vector.load %arg6[%c0_11, %c0_12] : memref<16x16xf32, #tpu.memory_space<vmem>>, vector<16x16xf32>
      tpu.vector_store %arg6[%c0_11, %c0_12], %12 {strides = array<i32>} : memref<16x16xf32, #tpu.memory_space<vmem>>, vector<16x16xf32>,
    } else {
    }
    %c0 = arith.constant 0 : index
    %c0_1 = arith.constant 0 : index
    %3 = vector.load %arg2[%c0, %c0_1] : memref<16x8xf32, #tpu.memory_space<vmem>>, vector<16x8xf32>
    %c0_2 = arith.constant 0 : index
    %c0_3 = arith.constant 0 : index
    %4 = vector.load %arg3[%c0_2, %c0_3] : memref<8x16xf32, #tpu.memory_space<vmem>>, vector<8x16xf32>
    %cst = arith.constant dense<0.000000e+00> : vector<16x16xf32>
    %5 = tpu.matmul %3, %4, %cst {dimension_numbers = #tpu.dot_dimension_numbers<[1], [0], [0], [1], [0, 0, 1, 1], [], []>} : vector<16x8xf32>, vector<8x16xf32>, vector<16x16xf32> -> vector<16x16xf32>
    %c0_4 = arith.constant 0 : index
    %c0_5 = arith.constant 0 : index
    %6 = vector.load %arg6[%c0_4, %c0_5] : memref<16x16xf32, #tpu.memory_space<vmem>>, vector<16x16xf32>
    %7 = arith.addf %6, %5 : vector<16x16xf32>
    %c0_6 = arith.constant 0 : index
    %c0_7 = arith.constant 0 : index
    %8 = vector.load %arg6[%c0_6, %c0_7] : memref<16x16xf32, #tpu.memory_space<vmem>>, vector<16x16xf32>
    tpu.vector_store %arg6[%c0_6, %c0_7], %7 {strides = array<i32>} : memref<16x16xf32, #tpu.memory_space<vmem>>, vector<16x16xf32>,
    %c0_i32_8 = arith.constant 0 : i32
    %9 = arith.cmpi eq, %arg1, %c0_i32_8 : i32
    %10 = arith.extui %9 : i1 to i32
    %c0_i32_9 = arith.constant 0 : i32
    %11 = arith.cmpi ne, %10, %c0_i32_9 : i32
    scf.if %11 {
      %c0_10 = arith.constant 0 : index
      %c0_11 = arith.constant 0 : index
      %12 = vector.load %arg6[%c0_10, %c0_11] : memref<16x16xf32, #tpu.memory_space<vmem>>, vector<16x16xf32>
      %cst_12 = arith.constant 0.000000e+00 : f32
      %13 = vector.broadcast %cst_12 : f32 to vector<16x16xf32>
      %14 = arith.maximumf %12, %13 : vector<16x16xf32>
      %c0_13 = arith.constant 0 : index
      %c0_14 = arith.constant 0 : index
      %15 = vector.load %arg4[%c0_13, %c0_14] : memref<16x16xf32, #tpu.memory_space<vmem>>, vector<16x16xf32>
      %cst_15 = arith.constant dense<0.000000e+00> : vector<16x16xf32>
      %16 = tpu.matmul %14, %15, %cst_15 {dimension_numbers = #tpu.dot_dimension_numbers<[1], [0], [0], [1], [0, 0, 1, 1], [], []>} : vector<16x16xf32>, vector<16x16xf32>, vector<16x16xf32> -> vector<16x16xf32>
      %c0_16 = arith.constant 0 : index
      %c0_17 = arith.constant 0 : index
      %17 = vector.load %arg5[%c0_16, %c0_17] : memref<16x16xf32, #tpu.memory_space<vmem>>, vector<16x16xf32>
      tpu.vector_store %arg5[%c0_16, %c0_17], %16 {strides = array<i32>} : memref<16x16xf32, #tpu.memory_space<vmem>>, vector<16x16xf32>,
    } else {
    }
    return
  }
  func.func @transform_0(%arg0: i32, %arg1: i32) -> (i32, i32) {
    %c0_i32 = arith.constant 0 : i32
    return %arg0, %arg1 : i32, i32
  }
  func.func @transform_1(%arg0: i32, %arg1: i32) -> (i32, i32) {
    %c0_i32 = arith.constant 0 : i32
    %c0_i32_0 = arith.constant 0 : i32
    return %arg1, %c0_i32 : i32, i32
  }
  func.func @transform_2(%arg0: i32, %arg1: i32) -> (i32, i32) {
    %c0_i32 = arith.constant 0 : i32
    %c0_i32_0 = arith.constant 0 : i32
    %c0_i32_1 = arith.constant 0 : i32
    return %c0_i32, %c0_i32_0 : i32, i32
  }
  func.func @transform_3(%arg0: i32, %arg1: i32) -> (i32, i32) {
    %c0_i32 = arith.constant 0 : i32
    %c0_i32_0 = arith.constant 0 : i32
    return %arg0, %c0_i32 : i32, i32
  }
}

module attributes {stable_mosaic.version = 11 : i64} {
  func.func @_head_reparam_kernel(%arg0: i32, %arg1: i32, %arg2: memref<16x8xf32, #tpu.memory_space<vmem>>, %arg3: memref<16x16xf32, #tpu.memory_space<vmem>>, %arg4: memref<8x8xf32, #tpu.memory_space<vmem>>, %arg5: memref<8x8xf32, #tpu.memory_space<vmem>>, %arg6: memref<8x16xf32, #tpu.memory_space<vmem>>) attributes {dimension_semantics = [#tpu.dimension_semantics<parallel>, #tpu.dimension_semantics<arbitrary>], iteration_bounds = array<i64: 1, 1>, scalar_prefetch = 0 : i64, scratch_operands = 1 : i64, tpu.core_type = #tpu.core_type<tc>, window_params = [{transform_indices = @transform_0, window_bounds = array<i64: 16, 8>}, {transform_indices = @transform_1, window_bounds = array<i64: 16, 16>}, {transform_indices = @transform_2, window_bounds = array<i64: 8, 8>}, {transform_indices = @transform_3, window_bounds = array<i64: 8, 8>}]} {
    %c0_i32 = arith.constant 0 : i32
    %0 = arith.cmpi eq, %arg1, %c0_i32 : i32
    %1 = arith.extui %0 : i1 to i32
    %c0_i32_0 = arith.constant 0 : i32
    %2 = arith.cmpi ne, %1, %c0_i32_0 : i32
    scf.if %2 {
      %cst_10 = arith.constant 0.000000e+00 : f32
      %12 = vector.broadcast %cst_10 : f32 to vector<8x16xf32>
      %c0_11 = arith.constant 0 : index
      %c0_12 = arith.constant 0 : index
      %13 = vector.load %arg6[%c0_11, %c0_12] : memref<8x16xf32, #tpu.memory_space<vmem>>, vector<8x16xf32>
      tpu.vector_store %arg6[%c0_11, %c0_12], %12 {strides = array<i32>} : memref<8x16xf32, #tpu.memory_space<vmem>>, vector<8x16xf32>,
    } else {
    }
    %c0 = arith.constant 0 : index
    %c0_1 = arith.constant 0 : index
    %3 = vector.load %arg2[%c0, %c0_1] : memref<16x8xf32, #tpu.memory_space<vmem>>, vector<16x8xf32>
    %c0_2 = arith.constant 0 : index
    %c0_3 = arith.constant 0 : index
    %4 = vector.load %arg3[%c0_2, %c0_3] : memref<16x16xf32, #tpu.memory_space<vmem>>, vector<16x16xf32>
    %cst = arith.constant dense<0.000000e+00> : vector<8x16xf32>
    %5 = tpu.matmul %3, %4, %cst {dimension_numbers = #tpu.dot_dimension_numbers<[0], [0], [1], [1], [0, 1, 1, 1], [], []>} : vector<16x8xf32>, vector<16x16xf32>, vector<8x16xf32> -> vector<8x16xf32>
    %c0_4 = arith.constant 0 : index
    %c0_5 = arith.constant 0 : index
    %6 = vector.load %arg6[%c0_4, %c0_5] : memref<8x16xf32, #tpu.memory_space<vmem>>, vector<8x16xf32>
    %7 = arith.addf %6, %5 : vector<8x16xf32>
    %c0_6 = arith.constant 0 : index
    %c0_7 = arith.constant 0 : index
    %8 = vector.load %arg6[%c0_6, %c0_7] : memref<8x16xf32, #tpu.memory_space<vmem>>, vector<8x16xf32>
    tpu.vector_store %arg6[%c0_6, %c0_7], %7 {strides = array<i32>} : memref<8x16xf32, #tpu.memory_space<vmem>>, vector<8x16xf32>,
    %c0_i32_8 = arith.constant 0 : i32
    %9 = arith.cmpi eq, %arg1, %c0_i32_8 : i32
    %10 = arith.extui %9 : i1 to i32
    %c0_i32_9 = arith.constant 0 : i32
    %11 = arith.cmpi ne, %10, %c0_i32_9 : i32
    scf.if %11 {
      %c0_10 = arith.constant 0 : index
      %c0_11 = arith.constant 0 : index
      %12 = vector.load %arg6[%c0_10, %c0_11] : memref<8x16xf32, #tpu.memory_space<vmem>>, vector<8x16xf32>
      %13 = vector.extract_strided_slice %12 {offsets = [0, 0], sizes = [8, 8], strides = [1, 1]} : vector<8x16xf32> to vector<8x8xf32>
      %14 = vector.extract_strided_slice %12 {offsets = [0, 8], sizes = [8, 8], strides = [1, 1]} : vector<8x16xf32> to vector<8x8xf32>
      %15 = math.exp %14 : vector<8x8xf32>
      %c0_12 = arith.constant 0 : index
      %c0_13 = arith.constant 0 : index
      %16 = vector.load %arg4[%c0_12, %c0_13] : memref<8x8xf32, #tpu.memory_space<vmem>>, vector<8x8xf32>
      %17 = arith.mulf %16, %15 : vector<8x8xf32>
      %18 = arith.addf %17, %13 : vector<8x8xf32>
      %c0_14 = arith.constant 0 : index
      %c0_15 = arith.constant 0 : index
      %19 = vector.load %arg5[%c0_14, %c0_15] : memref<8x8xf32, #tpu.memory_space<vmem>>, vector<8x8xf32>
      tpu.vector_store %arg5[%c0_14, %c0_15], %18 {strides = array<i32>} : memref<8x8xf32, #tpu.memory_space<vmem>>, vector<8x8xf32>,
    } else {
    }
    return
  }
  func.func @transform_0(%arg0: i32, %arg1: i32) -> (i32, i32) {
    %c0_i32 = arith.constant 0 : i32
    return %arg1, %arg0 : i32, i32
  }
  func.func @transform_1(%arg0: i32, %arg1: i32) -> (i32, i32) {
    %c0_i32 = arith.constant 0 : i32
    %c0_i32_0 = arith.constant 0 : i32
    return %arg1, %c0_i32 : i32, i32
  }
  func.func @transform_2(%arg0: i32, %arg1: i32) -> (i32, i32) {
    %c0_i32 = arith.constant 0 : i32
    %c0_i32_0 = arith.constant 0 : i32
    return %arg0, %c0_i32 : i32, i32
  }
  func.func @transform_3(%arg0: i32, %arg1: i32) -> (i32, i32) {
    %c0_i32 = arith.constant 0 : i32
    %c0_i32_0 = arith.constant 0 : i32
    return %arg0, %c0_i32 : i32, i32
  }
}

module attributes {stable_mosaic.version = 11 : i64} {
  func.func @_xw_kernel(%arg0: i32, %arg1: memref<8x8xf32, #tpu.memory_space<vmem>>, %arg2: memref<8x16xf32, #tpu.memory_space<vmem>>, %arg3: memref<8x16xf32, #tpu.memory_space<vmem>>) attributes {dimension_semantics = [#tpu.dimension_semantics<parallel>], iteration_bounds = array<i64: 1>, scalar_prefetch = 0 : i64, scratch_operands = 0 : i64, tpu.core_type = #tpu.core_type<tc>, window_params = [{transform_indices = @transform_0, window_bounds = array<i64: 8, 8>}, {pipeline_mode = #tpu.pipeline_mode<synchronous>, transform_indices = @transform_1, window_bounds = array<i64: 8, 16>}, {transform_indices = @transform_2, window_bounds = array<i64: 8, 16>}]} {
    %c0 = arith.constant 0 : index
    %c0_0 = arith.constant 0 : index
    %0 = vector.load %arg1[%c0, %c0_0] : memref<8x8xf32, #tpu.memory_space<vmem>>, vector<8x8xf32>
    %c0_1 = arith.constant 0 : index
    %c0_2 = arith.constant 0 : index
    %1 = vector.load %arg2[%c0_1, %c0_2] : memref<8x16xf32, #tpu.memory_space<vmem>>, vector<8x16xf32>
    %cst = arith.constant dense<0.000000e+00> : vector<8x16xf32>
    %2 = tpu.matmul %0, %1, %cst {dimension_numbers = #tpu.dot_dimension_numbers<[1], [0], [0], [1], [0, 0, 1, 1], [], []>} : vector<8x8xf32>, vector<8x16xf32>, vector<8x16xf32> -> vector<8x16xf32>
    %c0_3 = arith.constant 0 : index
    %c0_4 = arith.constant 0 : index
    %3 = vector.load %arg3[%c0_3, %c0_4] : memref<8x16xf32, #tpu.memory_space<vmem>>, vector<8x16xf32>
    tpu.vector_store %arg3[%c0_3, %c0_4], %2 {strides = array<i32>} : memref<8x16xf32, #tpu.memory_space<vmem>>, vector<8x16xf32>,
    return
  }
  func.func @transform_0(%arg0: i32) -> (i32, i32) {
    %c0_i32 = arith.constant 0 : i32
    %c0_i32_0 = arith.constant 0 : i32
    return %arg0, %c0_i32 : i32, i32
  }
  func.func @transform_1(%arg0: i32) -> (i32, i32) {
    %c0_i32 = arith.constant 0 : i32
    %c0_i32_0 = arith.constant 0 : i32
    %c0_i32_1 = arith.constant 0 : i32
    return %c0_i32, %c0_i32_0 : i32, i32
  }
  func.func @transform_2(%arg0: i32) -> (i32, i32) {
    %c0_i32 = arith.constant 0 : i32
    %c0_i32_0 = arith.constant 0 : i32
    return %arg0, %c0_i32 : i32, i32
  }
}

module attributes {stable_mosaic.version = 11 : i64} {
  func.func @_decode_kernel(%arg0: i32, %arg1: i32, %arg2: memref<4x8xf32, #tpu.memory_space<vmem>>, %arg3: memref<8x8xf32, #tpu.memory_space<vmem>>, %arg4: memref<4x1xf32, #tpu.memory_space<vmem>>, %arg5: memref<1x8xf32, #tpu.memory_space<vmem>>, %arg6: memref<4x8xf32, #tpu.memory_space<vmem>>) attributes {dimension_semantics = [#tpu.dimension_semantics<parallel>, #tpu.dimension_semantics<parallel>], iteration_bounds = array<i64: 1, 1>, scalar_prefetch = 0 : i64, scratch_operands = 0 : i64, tpu.core_type = #tpu.core_type<tc>, window_params = [{transform_indices = @transform_0, window_bounds = array<i64: 4, 8>}, {pipeline_mode = #tpu.pipeline_mode<synchronous>, transform_indices = @transform_1, window_bounds = array<i64: 8, 8>}, {transform_indices = @transform_2, window_bounds = array<i64: 4, 1>}, {transform_indices = @transform_3, window_bounds = array<i64: 1, 8>}, {transform_indices = @transform_4, window_bounds = array<i64: 4, 8>}]} {
    %c8_i32 = arith.constant 8 : i32
    %0 = arith.muli %arg1, %c8_i32 : i32
    %1 = tpu.assume_multiple %0, 8 : i32
    %2 = arith.index_cast %1 : i32 to index
    %c0 = arith.constant 0 : index
    %3 = vector.load %arg3[%2, %c0] : memref<8x8xf32, #tpu.memory_space<vmem>>, vector<8x8xf32>
    %c0_0 = arith.constant 0 : index
    %c0_1 = arith.constant 0 : index
    %4 = vector.load %arg2[%c0_0, %c0_1] : memref<4x8xf32, #tpu.memory_space<vmem>>, vector<4x8xf32>
    %cst = arith.constant dense<0.000000e+00> : vector<4x8xf32>
    %5 = tpu.matmul %4, %3, %cst {dimension_numbers = #tpu.dot_dimension_numbers<[1], [1], [0], [0], [0, 0, 1, 0], [], []>} : vector<4x8xf32>, vector<8x8xf32>, vector<4x8xf32> -> vector<4x8xf32>
    %c0_2 = arith.constant 0 : index
    %c0_3 = arith.constant 0 : index
    %6 = vector.load %arg4[%c0_2, %c0_3] : memref<4x1xf32, #tpu.memory_space<vmem>>, vector<4x1xf32>
    %c0_4 = arith.constant 0 : index
    %c0_5 = arith.constant 0 : index
    %7 = vector.load %arg5[%c0_4, %c0_5] : memref<1x8xf32, #tpu.memory_space<vmem>>, vector<1x8xf32>
    %8 = vector.broadcast %6 : vector<4x1xf32> to vector<4x8xf32>
    %9 = vector.broadcast %7 : vector<1x8xf32> to vector<4x8xf32>
    %10 = arith.addf %8, %9 : vector<4x8xf32>
    %cst_6 = arith.constant 2.000000e+00 : f32
    %11 = vector.broadcast %cst_6 : f32 to vector<4x8xf32>
    %12 = arith.mulf %11, %5 : vector<4x8xf32>
    %13 = arith.subf %10, %12 : vector<4x8xf32>
    %cst_7 = arith.constant 0.000000e+00 : f32
    %14 = vector.broadcast %cst_7 : f32 to vector<4x8xf32>
    %15 = arith.maximumf %13, %14 : vector<4x8xf32>
    %cst_8 = arith.constant -5.000000e-01 : f32
    %16 = vector.broadcast %cst_8 : f32 to vector<4x8xf32>
    %17 = arith.mulf %16, %15 : vector<4x8xf32>
    %18 = math.exp %17 : vector<4x8xf32>
    %c0_9 = arith.constant 0 : index
    %c0_10 = arith.constant 0 : index
    %19 = vector.load %arg6[%c0_9, %c0_10] : memref<4x8xf32, #tpu.memory_space<vmem>>, vector<4x8xf32>
    tpu.vector_store %arg6[%c0_9, %c0_10], %18 {strides = array<i32>} : memref<4x8xf32, #tpu.memory_space<vmem>>, vector<4x8xf32>,
    return
  }
  func.func @transform_0(%arg0: i32, %arg1: i32) -> (i32, i32) {
    %c0_i32 = arith.constant 0 : i32
    %c0_i32_0 = arith.constant 0 : i32
    return %arg0, %c0_i32 : i32, i32
  }
  func.func @transform_1(%arg0: i32, %arg1: i32) -> (i32, i32) {
    %c0_i32 = arith.constant 0 : i32
    %c0_i32_0 = arith.constant 0 : i32
    %c0_i32_1 = arith.constant 0 : i32
    return %c0_i32, %c0_i32_0 : i32, i32
  }
  func.func @transform_2(%arg0: i32, %arg1: i32) -> (i32, i32) {
    %c0_i32 = arith.constant 0 : i32
    %c0_i32_0 = arith.constant 0 : i32
    return %arg0, %c0_i32 : i32, i32
  }
  func.func @transform_3(%arg0: i32, %arg1: i32) -> (i32, i32) {
    %c0_i32 = arith.constant 0 : i32
    %c0_i32_0 = arith.constant 0 : i32
    return %c0_i32, %arg1 : i32, i32
  }
  func.func @transform_4(%arg0: i32, %arg1: i32) -> (i32, i32) {
    %c0_i32 = arith.constant 0 : i32
    return %arg0, %arg1 : i32, i32
  }
}

module attributes {stable_mosaic.version = 11 : i64} {
  func.func @_decode_kernel(%arg0: i32, %arg1: i32, %arg2: memref<16x8xf32, #tpu.memory_space<vmem>>, %arg3: memref<8x8xf32, #tpu.memory_space<vmem>>, %arg4: memref<16x1xf32, #tpu.memory_space<vmem>>, %arg5: memref<1x8xf32, #tpu.memory_space<vmem>>, %arg6: memref<16x8xf32, #tpu.memory_space<vmem>>) attributes {dimension_semantics = [#tpu.dimension_semantics<parallel>, #tpu.dimension_semantics<parallel>], iteration_bounds = array<i64: 1, 1>, scalar_prefetch = 0 : i64, scratch_operands = 0 : i64, tpu.core_type = #tpu.core_type<tc>, window_params = [{transform_indices = @transform_0, window_bounds = array<i64: 16, 8>}, {pipeline_mode = #tpu.pipeline_mode<synchronous>, transform_indices = @transform_1, window_bounds = array<i64: 8, 8>}, {transform_indices = @transform_2, window_bounds = array<i64: 16, 1>}, {transform_indices = @transform_3, window_bounds = array<i64: 1, 8>}, {transform_indices = @transform_4, window_bounds = array<i64: 16, 8>}]} {
    %c8_i32 = arith.constant 8 : i32
    %0 = arith.muli %arg1, %c8_i32 : i32
    %1 = tpu.assume_multiple %0, 8 : i32
    %2 = arith.index_cast %1 : i32 to index
    %c0 = arith.constant 0 : index
    %3 = vector.load %arg3[%2, %c0] : memref<8x8xf32, #tpu.memory_space<vmem>>, vector<8x8xf32>
    %c0_0 = arith.constant 0 : index
    %c0_1 = arith.constant 0 : index
    %4 = vector.load %arg2[%c0_0, %c0_1] : memref<16x8xf32, #tpu.memory_space<vmem>>, vector<16x8xf32>
    %cst = arith.constant dense<0.000000e+00> : vector<16x8xf32>
    %5 = tpu.matmul %4, %3, %cst {dimension_numbers = #tpu.dot_dimension_numbers<[1], [1], [0], [0], [0, 0, 1, 0], [], []>} : vector<16x8xf32>, vector<8x8xf32>, vector<16x8xf32> -> vector<16x8xf32>
    %c0_2 = arith.constant 0 : index
    %c0_3 = arith.constant 0 : index
    %6 = vector.load %arg4[%c0_2, %c0_3] : memref<16x1xf32, #tpu.memory_space<vmem>>, vector<16x1xf32>
    %c0_4 = arith.constant 0 : index
    %c0_5 = arith.constant 0 : index
    %7 = vector.load %arg5[%c0_4, %c0_5] : memref<1x8xf32, #tpu.memory_space<vmem>>, vector<1x8xf32>
    %8 = vector.broadcast %6 : vector<16x1xf32> to vector<16x8xf32>
    %9 = vector.broadcast %7 : vector<1x8xf32> to vector<16x8xf32>
    %10 = arith.addf %8, %9 : vector<16x8xf32>
    %cst_6 = arith.constant 2.000000e+00 : f32
    %11 = vector.broadcast %cst_6 : f32 to vector<16x8xf32>
    %12 = arith.mulf %11, %5 : vector<16x8xf32>
    %13 = arith.subf %10, %12 : vector<16x8xf32>
    %cst_7 = arith.constant 0.000000e+00 : f32
    %14 = vector.broadcast %cst_7 : f32 to vector<16x8xf32>
    %15 = arith.maximumf %13, %14 : vector<16x8xf32>
    %cst_8 = arith.constant -5.000000e-01 : f32
    %16 = vector.broadcast %cst_8 : f32 to vector<16x8xf32>
    %17 = arith.mulf %16, %15 : vector<16x8xf32>
    %18 = math.exp %17 : vector<16x8xf32>
    %c0_9 = arith.constant 0 : index
    %c0_10 = arith.constant 0 : index
    %19 = vector.load %arg6[%c0_9, %c0_10] : memref<16x8xf32, #tpu.memory_space<vmem>>, vector<16x8xf32>
    tpu.vector_store %arg6[%c0_9, %c0_10], %18 {strides = array<i32>} : memref<16x8xf32, #tpu.memory_space<vmem>>, vector<16x8xf32>,
    return
  }
  func.func @transform_0(%arg0: i32, %arg1: i32) -> (i32, i32) {
    %c0_i32 = arith.constant 0 : i32
    %c0_i32_0 = arith.constant 0 : i32
    return %arg0, %c0_i32 : i32, i32
  }
  func.func @transform_1(%arg0: i32, %arg1: i32) -> (i32, i32) {
    %c0_i32 = arith.constant 0 : i32
    %c0_i32_0 = arith.constant 0 : i32
    %c0_i32_1 = arith.constant 0 : i32
    return %c0_i32, %c0_i32_0 : i32, i32
  }
  func.func @transform_2(%arg0: i32, %arg1: i32) -> (i32, i32) {
    %c0_i32 = arith.constant 0 : i32
    %c0_i32_0 = arith.constant 0 : i32
    return %arg0, %c0_i32 : i32, i32
  }
  func.func @transform_3(%arg0: i32, %arg1: i32) -> (i32, i32) {
    %c0_i32 = arith.constant 0 : i32
    %c0_i32_0 = arith.constant 0 : i32
    return %c0_i32, %arg1 : i32, i32
  }
  func.func @transform_4(%arg0: i32, %arg1: i32) -> (i32, i32) {
    %c0_i32 = arith.constant 0 : i32
    return %arg0, %arg1 : i32, i32
  }
}

</mosaic_0001>

<llo_original>
// kernel: vbgae2_forward.8
$region0: #{vbgae2_forward.8}
  #allocation0 [shape = 'u32[]', space=smem, size = 0x4, offset = 0x4, fixed_abs, tag = 'smem constant byte address 0x4 - core index']
  #allocation1 [shape = 'u32[144,128]{1,0:T(1,128)}', space=vmem, size = 0x12000, scoped, tag = 'internal scratch']
  %s0 = inlined_call_operand.vmem [shape: f32[16,8], index: 0, kind: input, shape index: {}]
  %s1 = inlined_call_operand.vmem [shape: f32[8,16], index: 1, kind: input, shape index: {}]
  %s2 = inlined_call_operand.vmem [shape: f32[16,16], index: 2, kind: output, shape index: {}]
  %s3 = sld [smem:[#allocation0]]
  $region18: #{vbgae2_forward.8} parent=0
    _
  %s5 = ssub.s32 1, %s3
  %s6 = scalar_select 0, %s5, %s3
  // Predicated region
  $region2: #{vbgae2_forward.8} parent=0 // pred_check
    _
  $region3: #{vbgae2_forward.8} parent=0 // pred_check_branch
    %8 = sbr.rel (0) target = $region5
  $region4: #{vbgae2_forward.8} parent=0 // pred_region
    _
  $region5: #{vbgae2_forward.8} parent=0 // pred_fallthru
    _
  // Predicated region
  $region6: #{vbgae2_forward.8} parent=0 // pred_check
    _
  $region7: #{vbgae2_forward.8} parent=0 // pred_check_branch
    %10 = sbr.rel (0) target = $region9
  $region8: #{vbgae2_forward.8} parent=0 // pred_region
    _
  $region9: #{vbgae2_forward.8} parent=0 // pred_fallthru
    _
  %v11 = vld [vmem:[%s0] sm:$0xff]
  %v12 = vld [vmem:[%s0 + $0x8] sm:$0xff]
  %v13 = vld [vmem:[%s1] sm:$0xff]
  %vm14 = vcmask 64512
  %v16 = vsel %vm14, %v11, 0
  %v19 = vsel %vm14, %v12, 0
  %21 = vmatprep.subr.mxu0 0.0
  %22 = vmatpush1.msra.mxu0 %v13
  %23 = vmatprep.subr.mxu0 0.0
  %24 = vmatpush1.msra.mxu0 0.0
  %25 = vmatprep.subr.mxu0 0.0
  %26 = vmatpush1.msra.mxu0 0.0
  %27 = vmatprep.subr.mxu0 0.0
  %28 = vmatpush1.msra.mxu0 0.0
  %29 = vmatprep.subr.mxu0 0.0
  %30 = vmatpush1.msra.mxu0 0.0
  %31 = vmatprep.subr.mxu0 0.0
  %32 = vmatpush1.msra.mxu0 0.0
  %33 = vmatprep.subr.mxu0 0.0
  %34 = vmatpush1.msra.mxu0 0.0
  %35 = vmatprep.subr.mxu0 0.0
  %36 = vmatpush1.msra.mxu0 0.0
  %37 = vmatprep.subr.mxu0 0.0
  %38 = vmatpush1.msra.mxu0 0.0
  %39 = vmatprep.subr.mxu0 0.0
  %40 = vmatpush1.msra.mxu0 0.0
  %41 = vmatprep.subr.mxu0 0.0
  %42 = vmatpush1.msra.mxu0 0.0
  %43 = vmatprep.subr.mxu0 0.0
  %44 = vmatpush1.msra.mxu0 0.0
  %45 = vmatprep.subr.mxu0 0.0
  %46 = vmatpush1.msra.mxu0 0.0
  %47 = vmatprep.subr.mxu0 0.0
  %48 = vmatpush1.msra.mxu0 0.0
  %49 = vmatprep.subr.mxu0 0.0
  %50 = vmatpush1.msra.mxu0 0.0
  %51 = vmatprep.subr.mxu0 0.0
  %52 = vmatpush1.msra.mxu0 0.0
  %53 = vmatprep.subr.mxu0 0.0
  %54 = vmatpush1.msra.mxu0 0.0
  %55 = vmatprep.subr.mxu0 0.0
  %56 = vmatpush1.msra.mxu0 0.0
  %57 = vmatprep.subr.mxu0 0.0
  %58 = vmatpush1.msra.mxu0 0.0
  %59 = vmatprep.subr.mxu0 0.0
  %60 = vmatpush1.msra.mxu0 0.0
  %61 = vmatprep.subr.mxu0 0.0
  %62 = vmatpush1.msra.mxu0 0.0
  %63 = vmatprep.subr.mxu0 0.0
  %64 = vmatpush1.msra.mxu0 0.0
  %65 = vmatprep.subr.mxu0 0.0
  %66 = vmatpush1.msra.mxu0 0.0
  %67 = vmatprep.subr.mxu0 0.0
  %68 = vmatpush1.msra.mxu0 0.0
  %69 = vmatprep.subr.mxu0 0.0
  %70 = vmatpush1.msra.mxu0 0.0
  %71 = vmatprep.subr.mxu0 0.0
  %72 = vmatpush1.msra.mxu0 0.0
  %73 = vmatprep.subr.mxu0 0.0
  %74 = vmatpush1.msra.mxu0 0.0
  %75 = vmatprep.subr.mxu0 0.0
  %76 = vmatpush1.msra.mxu0 0.0
  %77 = vmatprep.subr.mxu0 0.0
  %78 = vmatpush1.msra.mxu0 0.0
  %79 = vmatprep.subr.mxu0 0.0
  %80 = vmatpush1.msra.mxu0 0.0
  %81 = vmatprep.subr.mxu0 0.0
  %82 = vmatpush1.msra.mxu0 0.0
  %83 = vmatprep.subr.mxu0 0.0
  %84 = vmatpush1.msra.mxu0 0.0
  %85 = vmatprep.mubr.f32.mxu0 0.0
  %86 = vmatmul.mubr.f32.gmra.mrb[0].mxu0 %v16
  %v87 = vpop.f32.mrb[0].mxu0
  %v88 = vadd.f32 0.0, %v87
  %v89 = vpop.f32.mrb[0].mxu0
  %90 = vmatprep.mubr.f32.mxu0 0.0
  %91 = vmatmul.mubr.f32.gmra.mrb[0].mxu0 %v19
  %v92 = vpop.f32.mrb[0].mxu0
  %v93 = vadd.f32 0.0, %v92
  %v94 = vpop.f32.mrb[0].mxu0
  %95 = vdwg.mxu0
  %vm96 = vcmask 130048
  %97 = vst.msk [vmem:[%s2] sm:$0xff] %vm96, %v88
  %98 = vst.msk [vmem:[%s2 + $0x8] sm:$0xff] %vm96, %v93
  // Predicated region
  $region10: #{vbgae2_forward.8} parent=0 // pred_check
    _
  $region11: #{vbgae2_forward.8} parent=0 // pred_check_branch
    %100 = sbr.rel (0) target = $region13
  $region12: #{vbgae2_forward.8} parent=0 // pred_region
    _
  $region13: #{vbgae2_forward.8} parent=0 // pred_fallthru
    _
  // Predicated region
  $region14: #{vbgae2_forward.8} parent=0 // pred_check
    _
  $region15: #{vbgae2_forward.8} parent=0 // pred_check_branch
    %102 = sbr.rel (0) target = $region17
  $region16: #{vbgae2_forward.8} parent=0 // pred_region
    _
  $region17: #{vbgae2_forward.8} parent=0 // pred_fallthru
    _

// kernel: vbgae2_forward.10
$region0: #{vbgae2_forward.10}
  #allocation0 [shape = 'u32[]', space=smem, size = 0x4, offset = 0x4, fixed_abs, tag = 'smem constant byte address 0x4 - core index']
  #allocation1 [shape = 'u32[144,128]{1,0:T(1,128)}', space=vmem, size = 0x12000, scoped, tag = 'internal scratch']
  #allocation2 [shape = 'f32[16,16]{1,0:T(8,128)}', space=vmem, size = 0x2000, scoped, tag = 'scratch operand']
  %s0 = inlined_call_operand.vmem [shape: f32[16,8], index: 0, kind: input, shape index: {}]
  %s1 = inlined_call_operand.vmem [shape: f32[8,16], index: 1, kind: input, shape index: {}]
  %s2 = inlined_call_operand.vmem [shape: f32[16,8], index: 2, kind: input, shape index: {}]
  %s3 = inlined_call_operand.vmem [shape: f32[16,8], index: 3, kind: input, shape index: {}]
  %s4 = inlined_call_operand.vmem [shape: f32[16,8], index: 4, kind: output, shape index: {0}]
  %s5 = inlined_call_operand.vmem [shape: f32[16,8], index: 5, kind: output, shape index: {1}]
  %6 = xla_tuple %s4, %s5
  %s7 = sld [smem:[#allocation0]]
  $region42: #{vbgae2_forward.10} parent=0
    _
  %s9 = ssub.s32 1, %s7
  %s10 = scalar_select 0, %s9, %s7
  // Predicated region
  $region2: #{vbgae2_forward.10} parent=0 // pred_check
    _
  $region3: #{vbgae2_forward.10} parent=0 // pred_check_branch
    %12 = sbr.rel (0) target = $region5
  $region4: #{vbgae2_forward.10} parent=0 // pred_region
    _
  $region5: #{vbgae2_forward.10} parent=0 // pred_fallthru
    _
  // Predicated region
  $region6: #{vbgae2_forward.10} parent=0 // pred_check
    _
  $region7: #{vbgae2_forward.10} parent=0 // pred_check_branch
    %14 = sbr.rel (0) target = $region9
  $region8: #{vbgae2_forward.10} parent=0 // pred_region
    _
  $region9: #{vbgae2_forward.10} parent=0 // pred_fallthru
    _
  // Predicated region
  $region10: #{vbgae2_forward.10} parent=0 // pred_check
    _
  $region11: #{vbgae2_forward.10} parent=0 // pred_check_branch
    %16 = sbr.rel (0) target = $region13
  $region12: #{vbgae2_forward.10} parent=0 // pred_region
    _
  $region13: #{vbgae2_forward.10} parent=0 // pred_fallthru
    _
  // Predicated region
  $region14: #{vbgae2_forward.10} parent=0 // pred_check
    _
  $region15: #{vbgae2_forward.10} parent=0 // pred_check_branch
    %18 = sbr.rel (0) target = $region17
  $region16: #{vbgae2_forward.10} parent=0 // pred_region
    _
  $region17: #{vbgae2_forward.10} parent=0 // pred_fallthru
    _
  %p19 = scmp.eq.s32.totalorder 0, 0
  // Predicated region
  $region18: #{vbgae2_forward.10} parent=0 // pred_check
    %p20 = pneg %p19
  $region19: #{vbgae2_forward.10} parent=0 // pred_check_branch
    %22 = sbr.rel (%p20) target = $region21
  $region20: #{vbgae2_forward.10} parent=0 // pred_region
    %vm23 = vcmask 130048
    %24 = vst.msk [vmem:[#allocation2] sm:$0xff] %vm23, 0.0
    %25 = vst.msk [vmem:[#allocation2 + $0x8] sm:$0xff] %vm23, 0.0
  $region21: #{vbgae2_forward.10} parent=0 // pred_fallthru
    _
  %v26 = vld [vmem:[%s0] sm:$0xff]
  %v27 = vld [vmem:[%s0 + $0x8] sm:$0xff]
  %v28 = vld [vmem:[%s1] sm:$0xff]
  %vm29 = vcmask 64512
  %v31 = vsel %vm29, %v26, 0
  %v34 = vsel %vm29, %v27, 0
  %36 = vmatprep.subr.mxu0 0.0
  %37 = vmatpush1.msra.mxu0 %v28
  %38 = vmatprep.subr.mxu0 0.0
  %39 = vmatpush1.msra.mxu0 0.0
  %40 = vmatprep.subr.mxu0 0.0
  %41 = vmatpush1.msra.mxu0 0.0
  %42 = vmatprep.subr.mxu0 0.0
  %43 = vmatpush1.msra.mxu0 0.0
  %44 = vmatprep.subr.mxu0 0.0
  %45 = vmatpush1.msra.mxu0 0.0
  %46 = vmatprep.subr.mxu0 0.0
  %47 = vmatpush1.msra.mxu0 0.0
  %48 = vmatprep.subr.mxu0 0.0
  %49 = vmatpush1.msra.mxu0 0.0
  %50 = vmatprep.subr.mxu0 0.0
  %51 = vmatpush1.msra.mxu0 0.0
  %52 = vmatprep.subr.mxu0 0.0
  %53 = vmatpush1.msra.mxu0 0.0
  %54 = vmatprep.subr.mxu0 0.0
  %55 = vmatpush1.msra.mxu0 0.0
  %56 = vmatprep.subr.mxu0 0.0
  %57 = vmatpush1.msra.mxu0 0.0
  %58 = vmatprep.subr.mxu0 0.0
  %59 = vmatpush1.msra.mxu0 0.0
  %60 = vmatprep.subr.mxu0 0.0
  %61 = vmatpush1.msra.mxu0 0.0
  %62 = vmatprep.subr.mxu0 0.0
  %63 = vmatpush1.msra.mxu0 0.0
  %64 = vmatprep.subr.mxu0 0.0
  %65 = vmatpush1.msra.mxu0 0.0
  %66 = vmatprep.subr.mxu0 0.0
  %67 = vmatpush1.msra.mxu0 0.0
  %68 = vmatprep.subr.mxu0 0.0
  %69 = vmatpush1.msra.mxu0 0.0
  %70 = vmatprep.subr.mxu0 0.0
  %71 = vmatpush1.msra.mxu0 0.0
  %72 = vmatprep.subr.mxu0 0.0
  %73 = vmatpush1.msra.mxu0 0.0
  %74 = vmatprep.subr.mxu0 0.0
  %75 = vmatpush1.msra.mxu0 0.0
  %76 = vmatprep.subr.mxu0 0.0
  %77 = vmatpush1.msra.mxu0 0.0
  %78 = vmatprep.subr.mxu0 0.0
  %79 = vmatpush1.msra.mxu0 0.0
  %80 = vmatprep.subr.mxu0 0.0
  %81 = vmatpush1.msra.mxu0 0.0
  %82 = vmatprep.subr.mxu0 0.0
  %83 = vmatpush1.msra.mxu0 0.0
  %84 = vmatprep.subr.mxu0 0.0
  %85 = vmatpush1.msra.mxu0 0.0
  %86 = vmatprep.subr.mxu0 0.0
  %87 = vmatpush1.msra.mxu0 0.0
  %88 = vmatprep.subr.mxu0 0.0
  %89 = vmatpush1.msra.mxu0 0.0
  %90 = vmatprep.subr.mxu0 0.0
  %91 = vmatpush1.msra.mxu0 0.0
  %92 = vmatprep.subr.mxu0 0.0
  %93 = vmatpush1.msra.mxu0 0.0
  %94 = vmatprep.subr.mxu0 0.0
  %95 = vmatpush1.msra.mxu0 0.0
  %96 = vmatprep.subr.mxu0 0.0
  %97 = vmatpush1.msra.mxu0 0.0
  %98 = vmatprep.subr.mxu0 0.0
  %99 = vmatpush1.msra.mxu0 0.0
  %100 = vmatprep.mubr.f32.mxu0 0.0
  %101 = vmatmul.mubr.f32.gmra.mrb[0].mxu0 %v31
  %v102 = vpop.f32.mrb[0].mxu0
  %v103 = vadd.f32 0.0, %v102
  %v104 = vpop.f32.mrb[0].mxu0
  %105 = vmatprep.mubr.f32.mxu0 0.0
  %106 = vmatmul.mubr.f32.gmra.mrb[0].mxu0 %v34
  %v107 = vpop.f32.mrb[0].mxu0
  %v108 = vadd.f32 0.0, %v107
  %v109 = vpop.f32.mrb[0].mxu0
  %110 = vdwg.mxu0
  %v111 = vld [vmem:[#allocation2] sm:$0xff]
  %v112 = vld [vmem:[#allocation2 + $0x8] sm:$0xff]
  %v113 = vadd.f32 %v111, %v103
  %v114 = vadd.f32 %v112, %v108
  %vm115 = vcmask 130048
  %116 = vst.msk [vmem:[#allocation2] sm:$0xff] %vm115, %v113
  %117 = vst.msk [vmem:[#allocation2 + $0x8] sm:$0xff] %vm115, %v114
  // Predicated region
  $region22: #{vbgae2_forward.10} parent=0 // pred_check
    %p118 = pneg %p19
  $region23: #{vbgae2_forward.10} parent=0 // pred_check_branch
    %120 = sbr.rel (%p118) target = $region25
  $region24: #{vbgae2_forward.10} parent=0 // pred_region
    %v121 = vld [vmem:[#allocation2] sm:$0xff]
    %v122 = vld [vmem:[#allocation2 + $0x8] sm:$0xff]
    %v123 = vmul.f32 %v121, 1.442695
    %v124 = vpow.pop %v123
    %v125 = vmul.f32 %v122, 1.442695
    %v126 = vpow.pop %v125
    %v127 = vld [vmem:[%s2] sm:$0xff]
    %v128 = vld [vmem:[%s2 + $0x8] sm:$0xff]
    %131 = vrot.lane.b32.xlu0 %v124, 120
    %v132 = vpop.permute.xlu0 %131
    %133 = vrot.lane.b32.xlu0 %v126, 120
    %v134 = vpop.permute.xlu0 %133
    %v137 = vmul.f32 %v127, %v132
    %v138 = vmul.f32 %v128, %v134
    %v139 = vadd.f32 %v137, %v121
    %v140 = vadd.f32 %v138, %v122
    %141 = vst.msk [vmem:[%s4] sm:$0xff] %vm29, %v139
    %142 = vst.msk [vmem:[%s4 + $0x8] sm:$0xff] %vm29, %v140
    %v143 = vld [vmem:[%s3] sm:$0xff]
    %v144 = vld [vmem:[%s3 + $0x8] sm:$0xff]
    %v145 = vmul.f32 %v143, %v132
    %v146 = vmul.f32 %v144, %v134
    %v147 = vadd.f32 %v145, %v121
    %v148 = vadd.f32 %v146, %v122
    %149 = vst.msk [vmem:[%s5] sm:$0xff] %vm29, %v147
    %150 = vst.msk [vmem:[%s5 + $0x8] sm:$0xff] %vm29, %v148
  $region25: #{vbgae2_forward.10} parent=0 // pred_fallthru
    _
  // Predicated region
  $region26: #{vbgae2_forward.10} parent=0 // pred_check
    _
  $region27: #{vbgae2_forward.10} parent=0 // pred_check_branch
    %152 = sbr.rel (0) target = $region29
  $region28: #{vbgae2_forward.10} parent=0 // pred_region
    _
  $region29: #{vbgae2_forward.10} parent=0 // pred_fallthru
    _
  // Predicated region
  $region30: #{vbgae2_forward.10} parent=0 // pred_check
    _
  $region31: #{vbgae2_forward.10} parent=0 // pred_check_branch
    %154 = sbr.rel (0) target = $region33
  $region32: #{vbgae2_forward.10} parent=0 // pred_region
    _
  $region33: #{vbgae2_forward.10} parent=0 // pred_fallthru
    _
  // Predicated region
  $region34: #{vbgae2_forward.10} parent=0 // pred_check
    _
  $region35: #{vbgae2_forward.10} parent=0 // pred_check_branch
    %156 = sbr.rel (0) target = $region37
  $region36: #{vbgae2_forward.10} parent=0 // pred_region
    _
  $region37: #{vbgae2_forward.10} parent=0 // pred_fallthru
    _
  // Predicated region
  $region38: #{vbgae2_forward.10} parent=0 // pred_check
    _
  $region39: #{vbgae2_forward.10} parent=0 // pred_check_branch
    %158 = sbr.rel (0) target = $region41
  $region40: #{vbgae2_forward.10} parent=0 // pred_region
    _
  $region41: #{vbgae2_forward.10} parent=0 // pred_fallthru
    _

// kernel: vbgae2_forward.9
$region0: #{vbgae2_forward.9}
  #allocation0 [shape = 'u32[]', space=smem, size = 0x4, offset = 0x4, fixed_abs, tag = 'smem constant byte address 0x4 - core index']
  #allocation1 [shape = 'u32[144,128]{1,0:T(1,128)}', space=vmem, size = 0x12000, scoped, tag = 'internal scratch']
  #allocation2 [shape = 'f32[8,16]{1,0:T(8,128)}', space=vmem, size = 0x1000, scoped, tag = 'scratch operand']
  %s0 = inlined_call_operand.vmem [shape: f32[16,8], index: 0, kind: input, shape index: {}]
  %s1 = inlined_call_operand.vmem [shape: f32[16,16], index: 1, kind: input, shape index: {}]
  %s2 = inlined_call_operand.vmem [shape: f32[16,16], index: 2, kind: input, shape index: {}]
  %s3 = inlined_call_operand.vmem [shape: f32[8,16], index: 3, kind: output, shape index: {}]
  %s4 = sld [smem:[#allocation0]]
  $region30: #{vbgae2_forward.9} parent=0
    _
  %s6 = ssub.s32 1, %s4
  %s7 = scalar_select 0, %s6, %s4
  // Predicated region
  $region2: #{vbgae2_forward.9} parent=0 // pred_check
    _
  $region3: #{vbgae2_forward.9} parent=0 // pred_check_branch
    %9 = sbr.rel (0) target = $region5
  $region4: #{vbgae2_forward.9} parent=0 // pred_region
    _
  $region5: #{vbgae2_forward.9} parent=0 // pred_fallthru
    _
  // Predicated region
  $region6: #{vbgae2_forward.9} parent=0 // pred_check
    _
  $region7: #{vbgae2_forward.9} parent=0 // pred_check_branch
    %11 = sbr.rel (0) target = $region9
  $region8: #{vbgae2_forward.9} parent=0 // pred_region
    _
  $region9: #{vbgae2_forward.9} parent=0 // pred_fallthru
    _
  // Predicated region
  $region10: #{vbgae2_forward.9} parent=0 // pred_check
    _
  $region11: #{vbgae2_forward.9} parent=0 // pred_check_branch
    %13 = sbr.rel (0) target = $region13
  $region12: #{vbgae2_forward.9} parent=0 // pred_region
    _
  $region13: #{vbgae2_forward.9} parent=0 // pred_fallthru
    _
  %p14 = scmp.eq.s32.totalorder 0, 0
  // Predicated region
  $region14: #{vbgae2_forward.9} parent=0 // pred_check
    %p15 = pneg %p14
  $region15: #{vbgae2_forward.9} parent=0 // pred_check_branch
    %17 = sbr.rel (%p15) target = $region17
  $region16: #{vbgae2_forward.9} parent=0 // pred_region
    %vm18 = vcmask 130048
    %19 = vst.msk [vmem:[#allocation2] sm:$0xff] %vm18, 0.0
  $region17: #{vbgae2_forward.9} parent=0 // pred_fallthru
    _
  %v20 = vld [vmem:[%s0] sm:$0xff]
  %v21 = vld [vmem:[%s0 + $0x8] sm:$0xff]
  %v22 = vld [vmem:[%s1] sm:$0xff]
  %v23 = vld [vmem:[%s1 + $0x8] sm:$0xff]
  %24 = vxpose.xlu0.b32.start [1/16] %v20, 128
  %25 = vxpose.xlu0.b32.cont [2/16] %v21, 128
  %26 = vxpose.xlu0.b32.cont [3/16] 0.0, 128
  %27 = vxpose.xlu0.b32.cont [4/16] 0.0, 128
  %28 = vxpose.xlu0.b32.cont [5/16] 0.0, 128
  %29 = vxpose.xlu0.b32.cont [6/16] 0.0, 128
  %30 = vxpose.xlu0.b32.cont [7/16] 0.0, 128
  %31 = vxpose.xlu0.b32.cont [8/16] 0.0, 128
  %32 = vxpose.xlu0.b32.cont [9/16] 0.0, 128
  %33 = vxpose.xlu0.b32.cont [10/16] 0.0, 128
  %34 = vxpose.xlu0.b32.cont [11/16] 0.0, 128
  %35 = vxpose.xlu0.b32.cont [12/16] 0.0, 128
  %36 = vxpose.xlu0.b32.cont [13/16] 0.0, 128
  %37 = vxpose.xlu0.b32.cont [14/16] 0.0, 128
  %38 = vxpose.xlu0.b32.cont [15/16] 0.0, 128
  %39 = vxpose.xlu0.b32.end [16/16] 0.0, 128
  %v40 = vpop.trf.xlu0
  %v41 = vpop.trf.xlu0
  %v42 = vpop.trf.xlu0
  %v43 = vpop.trf.xlu0
  %v44 = vpop.trf.xlu0
  %v45 = vpop.trf.xlu0
  %v46 = vpop.trf.xlu0
  %v47 = vpop.trf.xlu0
  %v48 = vpop.trf.xlu0
  %v49 = vpop.trf.xlu0
  %v50 = vpop.trf.xlu0
  %v51 = vpop.trf.xlu0
  %v52 = vpop.trf.xlu0
  %v53 = vpop.trf.xlu0
  %v54 = vpop.trf.xlu0
  %v55 = vpop.trf.xlu0
  %vm56 = vcmask 130048
  %v58 = vsel %vm56, %v40, 0
  %60 = vmatprep.subr.mxu0 0.0
  %61 = vmatpush1.msra.mxu0 %v22
  %62 = vmatprep.subr.mxu0 0.0
  %63 = vmatpush1.msra.mxu0 %v23
  %64 = vmatprep.subr.mxu0 0.0
  %65 = vmatpush1.msra.mxu0 0.0
  %66 = vmatprep.subr.mxu0 0.0
  %67 = vmatpush1.msra.mxu0 0.0
  %68 = vmatprep.subr.mxu0 0.0
  %69 = vmatpush1.msra.mxu0 0.0
  %70 = vmatprep.subr.mxu0 0.0
  %71 = vmatpush1.msra.mxu0 0.0
  %72 = vmatprep.subr.mxu0 0.0
  %73 = vmatpush1.msra.mxu0 0.0
  %74 = vmatprep.subr.mxu0 0.0
  %75 = vmatpush1.msra.mxu0 0.0
  %76 = vmatprep.subr.mxu0 0.0
  %77 = vmatpush1.msra.mxu0 0.0
  %78 = vmatprep.subr.mxu0 0.0
  %79 = vmatpush1.msra.mxu0 0.0
  %80 = vmatprep.subr.mxu0 0.0
  %81 = vmatpush1.msra.mxu0 0.0
  %82 = vmatprep.subr.mxu0 0.0
  %83 = vmatpush1.msra.mxu0 0.0
  %84 = vmatprep.subr.mxu0 0.0
  %85 = vmatpush1.msra.mxu0 0.0
  %86 = vmatprep.subr.mxu0 0.0
  %87 = vmatpush1.msra.mxu0 0.0
  %88 = vmatprep.subr.mxu0 0.0
  %89 = vmatpush1.msra.mxu0 0.0
  %90 = vmatprep.subr.mxu0 0.0
  %91 = vmatpush1.msra.mxu0 0.0
  %92 = vmatprep.subr.mxu0 0.0
  %93 = vmatpush1.msra.mxu0 0.0
  %94 = vmatprep.subr.mxu0 0.0
  %95 = vmatpush1.msra.mxu0 0.0
  %96 = vmatprep.subr.mxu0 0.0
  %97 = vmatpush1.msra.mxu0 0.0
  %98 = vmatprep.subr.mxu0 0.0
  %99 = vmatpush1.msra.mxu0 0.0
  %100 = vmatprep.subr.mxu0 0.0
  %101 = vmatpush1.msra.mxu0 0.0
  %102 = vmatprep.subr.mxu0 0.0
  %103 = vmatpush1.msra.mxu0 0.0
  %104 = vmatprep.subr.mxu0 0.0
  %105 = vmatpush1.msra.mxu0 0.0
  %106 = vmatprep.subr.mxu0 0.0
  %107 = vmatpush1.msra.mxu0 0.0
  %108 = vmatprep.subr.mxu0 0.0
  %109 = vmatpush1.msra.mxu0 0.0
  %110 = vmatprep.subr.mxu0 0.0
  %111 = vmatpush1.msra.mxu0 0.0
  %112 = vmatprep.subr.mxu0 0.0
  %113 = vmatpush1.msra.mxu0 0.0
  %114 = vmatprep.subr.mxu0 0.0
  %115 = vmatpush1.msra.mxu0 0.0
  %116 = vmatprep.subr.mxu0 0.0
  %117 = vmatpush1.msra.mxu0 0.0
  %118 = vmatprep.subr.mxu0 0.0
  %119 = vmatpush1.msra.mxu0 0.0
  %120 = vmatprep.subr.mxu0 0.0
  %121 = vmatpush1.msra.mxu0 0.0
  %122 = vmatprep.subr.mxu0 0.0
  %123 = vmatpush1.msra.mxu0 0.0
  %124 = vmatprep.mubr.f32.mxu0 0.0
  %125 = vmatmul.mubr.f32.gmra.mrb[0].mxu0 %v58
  %v126 = vpop.f32.mrb[0].mxu0
  %v127 = vadd.f32 0.0, %v126
  %v128 = vpop.f32.mrb[0].mxu0
  %129 = vdwg.mxu0
  %v130 = vld [vmem:[#allocation2] sm:$0xff]
  %v131 = vadd.f32 %v130, %v127
  %132 = vst.msk [vmem:[#allocation2] sm:$0xff] %vm56, %v131
  // Predicated region
  $region18: #{vbgae2_forward.9} parent=0 // pred_check
    %p133 = pneg %p14
  $region19: #{vbgae2_forward.9} parent=0 // pred_check_branch
    %135 = sbr.rel (%p133) target = $region21
  $region20: #{vbgae2_forward.9} parent=0 // pred_region
    %v136 = vld [vmem:[#allocation2] sm:$0xff]
    %v137 = vmax.f32 %v136, 0.0
    %v138 = vld [vmem:[%s2] sm:$0xff]
    %v139 = vld [vmem:[%s2 + $0x8] sm:$0xff]
    %v141 = vsel %vm56, %v137, 0
    %143 = vmatprep.subr.mxu0 0.0
    %144 = vmatpush1.msra.mxu0 %v138
    %145 = vmatprep.subr.mxu0 0.0
    %146 = vmatpush1.msra.mxu0 %v139
    %147 = vmatprep.subr.mxu0 0.0
    %148 = vmatpush1.msra.mxu0 0.0
    %149 = vmatprep.subr.mxu0 0.0
    %150 = vmatpush1.msra.mxu0 0.0
    %151 = vmatprep.subr.mxu0 0.0
    %152 = vmatpush1.msra.mxu0 0.0
    %153 = vmatprep.subr.mxu0 0.0
    %154 = vmatpush1.msra.mxu0 0.0
    %155 = vmatprep.subr.mxu0 0.0
    %156 = vmatpush1.msra.mxu0 0.0
    %157 = vmatprep.subr.mxu0 0.0
    %158 = vmatpush1.msra.mxu0 0.0
    %159 = vmatprep.subr.mxu0 0.0
    %160 = vmatpush1.msra.mxu0 0.0
    %161 = vmatprep.subr.mxu0 0.0
    %162 = vmatpush1.msra.mxu0 0.0
    %163 = vmatprep.subr.mxu0 0.0
    %164 = vmatpush1.msra.mxu0 0.0
    %165 = vmatprep.subr.mxu0 0.0
    %166 = vmatpush1.msra.mxu0 0.0
    %167 = vmatprep.subr.mxu0 0.0
    %168 = vmatpush1.msra.mxu0 0.0
    %169 = vmatprep.subr.mxu0 0.0
    %170 = vmatpush1.msra.mxu0 0.0
    %171 = vmatprep.subr.mxu0 0.0
    %172 = vmatpush1.msra.mxu0 0.0
    %173 = vmatprep.subr.mxu0 0.0
    %174 = vmatpush1.msra.mxu0 0.0
    %175 = vmatprep.subr.mxu0 0.0
    %176 = vmatpush1.msra.mxu0 0.0
    %177 = vmatprep.subr.mxu0 0.0
    %178 = vmatpush1.msra.mxu0 0.0
    %179 = vmatprep.subr.mxu0 0.0
    %180 = vmatpush1.msra.mxu0 0.0
    %181 = vmatprep.subr.mxu0 0.0
    %182 = vmatpush1.msra.mxu0 0.0
    %183 = vmatprep.subr.mxu0 0.0
    %184 = vmatpush1.msra.mxu0 0.0
    %185 = vmatprep.subr.mxu0 0.0
    %186 = vmatpush1.msra.mxu0 0.0
    %187 = vmatprep.subr.mxu0 0.0
    %188 = vmatpush1.msra.mxu0 0.0
    %189 = vmatprep.subr.mxu0 0.0
    %190 = vmatpush1.msra.mxu0 0.0
    %191 = vmatprep.subr.mxu0 0.0
    %192 = vmatpush1.msra.mxu0 0.0
    %193 = vmatprep.subr.mxu0 0.0
    %194 = vmatpush1.msra.mxu0 0.0
    %195 = vmatprep.subr.mxu0 0.0
    %196 = vmatpush1.msra.mxu0 0.0
    %197 = vmatprep.subr.mxu0 0.0
    %198 = vmatpush1.msra.mxu0 0.0
    %199 = vmatprep.subr.mxu0 0.0
    %200 = vmatpush1.msra.mxu0 0.0
    %201 = vmatprep.subr.mxu0 0.0
    %202 = vmatpush1.msra.mxu0 0.0
    %203 = vmatprep.subr.mxu0 0.0
    %204 = vmatpush1.msra.mxu0 0.0
    %205 = vmatprep.subr.mxu0 0.0
    %206 = vmatpush1.msra.mxu0 0.0
    %207 = vmatprep.mubr.f32.mxu0 0.0
    %208 = vmatmul.mubr.f32.gmra.mrb[0].mxu0 %v141
    %v209 = vpop.f32.mrb[0].mxu0
    %v210 = vadd.f32 0.0, %v209
    %v211 = vpop.f32.mrb[0].mxu0
    %212 = vdwg.mxu0
    %213 = vst.msk [vmem:[%s3] sm:$0xff] %vm56, %v210
  $region21: #{vbgae2_forward.9} parent=0 // pred_fallthru
    _
  // Predicated region
  $region22: #{vbgae2_forward.9} parent=0 // pred_check
    _
  $region23: #{vbgae2_forward.9} parent=0 // pred_check_branch
    %215 = sbr.rel (0) target = $region25
  $region24: #{vbgae2_forward.9} parent=0 // pred_region
    _
  $region25: #{vbgae2_forward.9} parent=0 // pred_fallthru
    _
  // Predicated region
  $region26: #{vbgae2_forward.9} parent=0 // pred_check
    _
  $region27: #{vbgae2_forward.9} parent=0 // pred_check_branch
    %217 = sbr.rel (0) target = $region29
  $region28: #{vbgae2_forward.9} parent=0 // pred_region
    _
  $region29: #{vbgae2_forward.9} parent=0 // pred_fallthru
    _

// kernel: vbgae2_forward.13
$region0: #{vbgae2_forward.13}
  #allocation0 [shape = 'u32[]', space=smem, size = 0x4, offset = 0x4, fixed_abs, tag = 'smem constant byte address 0x4 - core index']
  #allocation1 [shape = 'u32[144,128]{1,0:T(1,128)}', space=vmem, size = 0x12000, scoped, tag = 'internal scratch']
  #allocation2 [shape = 'f32[8,16]{1,0:T(8,128)}', space=vmem, size = 0x1000, scoped, tag = 'scratch operand']
  %s0 = inlined_call_operand.vmem [shape: f32[16,8], index: 0, kind: input, shape index: {}]
  %s1 = inlined_call_operand.vmem [shape: f32[16,16], index: 1, kind: input, shape index: {}]
  %s2 = inlined_call_operand.vmem [shape: f32[8,8], index: 2, kind: input, shape index: {}]
  %s3 = inlined_call_operand.vmem [shape: f32[8,8], index: 3, kind: output, shape index: {}]
  %s4 = sld [smem:[#allocation0]]
  $region30: #{vbgae2_forward.13} parent=0
    _
  %s6 = ssub.s32 1, %s4
  %s7 = scalar_select 0, %s6, %s4
  // Predicated region
  $region2: #{vbgae2_forward.13} parent=0 // pred_check
    _
  $region3: #{vbgae2_forward.13} parent=0 // pred_check_branch
    %9 = sbr.rel (0) target = $region5
  $region4: #{vbgae2_forward.13} parent=0 // pred_region
    _
  $region5: #{vbgae2_forward.13} parent=0 // pred_fallthru
    _
  // Predicated region
  $region6: #{vbgae2_forward.13} parent=0 // pred_check
    _
  $region7: #{vbgae2_forward.13} parent=0 // pred_check_branch
    %11 = sbr.rel (0) target = $region9
  $region8: #{vbgae2_forward.13} parent=0 // pred_region
    _
  $region9: #{vbgae2_forward.13} parent=0 // pred_fallthru
    _
  // Predicated region
  $region10: #{vbgae2_forward.13} parent=0 // pred_check
    _
  $region11: #{vbgae2_forward.13} parent=0 // pred_check_branch
    %13 = sbr.rel (0) target = $region13
  $region12: #{vbgae2_forward.13} parent=0 // pred_region
    _
  $region13: #{vbgae2_forward.13} parent=0 // pred_fallthru
    _
  %p14 = scmp.eq.s32.totalorder 0, 0
  // Predicated region
  $region14: #{vbgae2_forward.13} parent=0 // pred_check
    %p15 = pneg %p14
  $region15: #{vbgae2_forward.13} parent=0 // pred_check_branch
    %17 = sbr.rel (%p15) target = $region17
  $region16: #{vbgae2_forward.13} parent=0 // pred_region
    %vm18 = vcmask 130048
    %19 = vst.msk [vmem:[#allocation2] sm:$0xff] %vm18, 0.0
  $region17: #{vbgae2_forward.13} parent=0 // pred_fallthru
    _
  %v20 = vld [vmem:[%s0] sm:$0xff]
  %v21 = vld [vmem:[%s0 + $0x8] sm:$0xff]
  %v22 = vld [vmem:[%s1] sm:$0xff]
  %v23 = vld [vmem:[%s1 + $0x8] sm:$0xff]
  %24 = vxpose.xlu0.b32.start [1/16] %v20, 128
  %25 = vxpose.xlu0.b32.cont [2/16] %v21, 128
  %26 = vxpose.xlu0.b32.cont [3/16] 0.0, 128
  %27 = vxpose.xlu0.b32.cont [4/16] 0.0, 128
  %28 = vxpose.xlu0.b32.cont [5/16] 0.0, 128
  %29 = vxpose.xlu0.b32.cont [6/16] 0.0, 128
  %30 = vxpose.xlu0.b32.cont [7/16] 0.0, 128
  %31 = vxpose.xlu0.b32.cont [8/16] 0.0, 128
  %32 = vxpose.xlu0.b32.cont [9/16] 0.0, 128
  %33 = vxpose.xlu0.b32.cont [10/16] 0.0, 128
  %34 = vxpose.xlu0.b32.cont [11/16] 0.0, 128
  %35 = vxpose.xlu0.b32.cont [12/16] 0.0, 128
  %36 = vxpose.xlu0.b32.cont [13/16] 0.0, 128
  %37 = vxpose.xlu0.b32.cont [14/16] 0.0, 128
  %38 = vxpose.xlu0.b32.cont [15/16] 0.0, 128
  %39 = vxpose.xlu0.b32.end [16/16] 0.0, 128
  %v40 = vpop.trf.xlu0
  %v41 = vpop.trf.xlu0
  %v42 = vpop.trf.xlu0
  %v43 = vpop.trf.xlu0
  %v44 = vpop.trf.xlu0
  %v45 = vpop.trf.xlu0
  %v46 = vpop.trf.xlu0
  %v47 = vpop.trf.xlu0
  %v48 = vpop.trf.xlu0
  %v49 = vpop.trf.xlu0
  %v50 = vpop.trf.xlu0
  %v51 = vpop.trf.xlu0
  %v52 = vpop.trf.xlu0
  %v53 = vpop.trf.xlu0
  %v54 = vpop.trf.xlu0
  %v55 = vpop.trf.xlu0
  %vm56 = vcmask 130048
  %v58 = vsel %vm56, %v40, 0
  %60 = vmatprep.subr.mxu0 0.0
  %61 = vmatpush1.msra.mxu0 %v22
  %62 = vmatprep.subr.mxu0 0.0
  %63 = vmatpush1.msra.mxu0 %v23
  %64 = vmatprep.subr.mxu0 0.0
  %65 = vmatpush1.msra.mxu0 0.0
  %66 = vmatprep.subr.mxu0 0.0
  %67 = vmatpush1.msra.mxu0 0.0
  %68 = vmatprep.subr.mxu0 0.0
  %69 = vmatpush1.msra.mxu0 0.0
  %70 = vmatprep.subr.mxu0 0.0
  %71 = vmatpush1.msra.mxu0 0.0
  %72 = vmatprep.subr.mxu0 0.0
  %73 = vmatpush1.msra.mxu0 0.0
  %74 = vmatprep.subr.mxu0 0.0
  %75 = vmatpush1.msra.mxu0 0.0
  %76 = vmatprep.subr.mxu0 0.0
  %77 = vmatpush1.msra.mxu0 0.0
  %78 = vmatprep.subr.mxu0 0.0
  %79 = vmatpush1.msra.mxu0 0.0
  %80 = vmatprep.subr.mxu0 0.0
  %81 = vmatpush1.msra.mxu0 0.0
  %82 = vmatprep.subr.mxu0 0.0
  %83 = vmatpush1.msra.mxu0 0.0
  %84 = vmatprep.subr.mxu0 0.0
  %85 = vmatpush1.msra.mxu0 0.0
  %86 = vmatprep.subr.mxu0 0.0
  %87 = vmatpush1.msra.mxu0 0.0
  %88 = vmatprep.subr.mxu0 0.0
  %89 = vmatpush1.msra.mxu0 0.0
  %90 = vmatprep.subr.mxu0 0.0
  %91 = vmatpush1.msra.mxu0 0.0
  %92 = vmatprep.subr.mxu0 0.0
  %93 = vmatpush1.msra.mxu0 0.0
  %94 = vmatprep.subr.mxu0 0.0
  %95 = vmatpush1.msra.mxu0 0.0
  %96 = vmatprep.subr.mxu0 0.0
  %97 = vmatpush1.msra.mxu0 0.0
  %98 = vmatprep.subr.mxu0 0.0
  %99 = vmatpush1.msra.mxu0 0.0
  %100 = vmatprep.subr.mxu0 0.0
  %101 = vmatpush1.msra.mxu0 0.0
  %102 = vmatprep.subr.mxu0 0.0
  %103 = vmatpush1.msra.mxu0 0.0
  %104 = vmatprep.subr.mxu0 0.0
  %105 = vmatpush1.msra.mxu0 0.0
  %106 = vmatprep.subr.mxu0 0.0
  %107 = vmatpush1.msra.mxu0 0.0
  %108 = vmatprep.subr.mxu0 0.0
  %109 = vmatpush1.msra.mxu0 0.0
  %110 = vmatprep.subr.mxu0 0.0
  %111 = vmatpush1.msra.mxu0 0.0
  %112 = vmatprep.subr.mxu0 0.0
  %113 = vmatpush1.msra.mxu0 0.0
  %114 = vmatprep.subr.mxu0 0.0
  %115 = vmatpush1.msra.mxu0 0.0
  %116 = vmatprep.subr.mxu0 0.0
  %117 = vmatpush1.msra.mxu0 0.0
  %118 = vmatprep.subr.mxu0 0.0
  %119 = vmatpush1.msra.mxu0 0.0
  %120 = vmatprep.subr.mxu0 0.0
  %121 = vmatpush1.msra.mxu0 0.0
  %122 = vmatprep.subr.mxu0 0.0
  %123 = vmatpush1.msra.mxu0 0.0
  %124 = vmatprep.mubr.f32.mxu0 0.0
  %125 = vmatmul.mubr.f32.gmra.mrb[0].mxu0 %v58
  %v126 = vpop.f32.mrb[0].mxu0
  %v127 = vadd.f32 0.0, %v126
  %v128 = vpop.f32.mrb[0].mxu0
  %129 = vdwg.mxu0
  %v130 = vld [vmem:[#allocation2] sm:$0xff]
  %v131 = vadd.f32 %v130, %v127
  %132 = vst.msk [vmem:[#allocation2] sm:$0xff] %vm56, %v131
  // Predicated region
  $region18: #{vbgae2_forward.13} parent=0 // pred_check
    %p133 = pneg %p14
  $region19: #{vbgae2_forward.13} parent=0 // pred_check_branch
    %135 = sbr.rel (%p133) target = $region21
  $region20: #{vbgae2_forward.13} parent=0 // pred_region
    %v136 = vld [vmem:[#allocation2] sm:$0xff]
    %v137 = vmul.f32 %v136, 1.442695
    %v138 = vpow.pop %v137
    %v139 = vld [vmem:[%s2] sm:$0xff]
    %141 = vrot.lane.b32.xlu0 %v138, 120
    %v142 = vpop.permute.xlu0 %141
    %v144 = vmul.f32 %v139, %v142
    %v145 = vadd.f32 %v144, %v136
    %vm146 = vcmask 64512
    %147 = vst.msk [vmem:[%s3] sm:$0xff] %vm146, %v145
  $region21: #{vbgae2_forward.13} parent=0 // pred_fallthru
    _
  // Predicated region
  $region22: #{vbgae2_forward.13} parent=0 // pred_check
    _
  $region23: #{vbgae2_forward.13} parent=0 // pred_check_branch
    %149 = sbr.rel (0) target = $region25
  $region24: #{vbgae2_forward.13} parent=0 // pred_region
    _
  $region25: #{vbgae2_forward.13} parent=0 // pred_fallthru
    _
  // Predicated region
  $region26: #{vbgae2_forward.13} parent=0 // pred_check
    _
  $region27: #{vbgae2_forward.13} parent=0 // pred_check_branch
    %151 = sbr.rel (0) target = $region29
  $region28: #{vbgae2_forward.13} parent=0 // pred_region
    _
  $region29: #{vbgae2_forward.13} parent=0 // pred_fallthru
    _

// kernel: vbgae2_forward.12
$region0: #{vbgae2_forward.12}
  #allocation0 [shape = 'u32[]', space=smem, size = 0x4, offset = 0x4, fixed_abs, tag = 'smem constant byte address 0x4 - core index']
  #allocation1 [shape = 'u32[144,128]{1,0:T(1,128)}', space=vmem, size = 0x12000, scoped, tag = 'internal scratch']
  #allocation2 [shape = 'f32[16,16]{1,0:T(8,128)}', space=vmem, size = 0x2000, scoped, tag = 'scratch operand']
  %s0 = inlined_call_operand.vmem [shape: f32[16,8], index: 0, kind: input, shape index: {}]
  %s1 = inlined_call_operand.vmem [shape: f32[8,16], index: 1, kind: input, shape index: {}]
  %s2 = inlined_call_operand.vmem [shape: f32[16,16], index: 2, kind: input, shape index: {}]
  %s3 = inlined_call_operand.vmem [shape: f32[16,16], index: 3, kind: output, shape index: {}]
  %s4 = sld [smem:[#allocation0]]
  $region30: #{vbgae2_forward.12} parent=0
    _
  %s6 = ssub.s32 1, %s4
  %s7 = scalar_select 0, %s6, %s4
  // Predicated region
  $region2: #{vbgae2_forward.12} parent=0 // pred_check
    _
  $region3: #{vbgae2_forward.12} parent=0 // pred_check_branch
    %9 = sbr.rel (0) target = $region5
  $region4: #{vbgae2_forward.12} parent=0 // pred_region
    _
  $region5: #{vbgae2_forward.12} parent=0 // pred_fallthru
    _
  // Predicated region
  $region6: #{vbgae2_forward.12} parent=0 // pred_check
    _
  $region7: #{vbgae2_forward.12} parent=0 // pred_check_branch
    %11 = sbr.rel (0) target = $region9
  $region8: #{vbgae2_forward.12} parent=0 // pred_region
    _
  $region9: #{vbgae2_forward.12} parent=0 // pred_fallthru
    _
  // Predicated region
  $region10: #{vbgae2_forward.12} parent=0 // pred_check
    _
  $region11: #{vbgae2_forward.12} parent=0 // pred_check_branch
    %13 = sbr.rel (0) target = $region13
  $region12: #{vbgae2_forward.12} parent=0 // pred_region
    _
  $region13: #{vbgae2_forward.12} parent=0 // pred_fallthru
    _
  %p14 = scmp.eq.s32.totalorder 0, 0
  // Predicated region
  $region14: #{vbgae2_forward.12} parent=0 // pred_check
    %p15 = pneg %p14
  $region15: #{vbgae2_forward.12} parent=0 // pred_check_branch
    %17 = sbr.rel (%p15) target = $region17
  $region16: #{vbgae2_forward.12} parent=0 // pred_region
    %vm18 = vcmask 130048
    %19 = vst.msk [vmem:[#allocation2] sm:$0xff] %vm18, 0.0
    %20 = vst.msk [vmem:[#allocation2 + $0x8] sm:$0xff] %vm18, 0.0
  $region17: #{vbgae2_forward.12} parent=0 // pred_fallthru
    _
  %v21 = vld [vmem:[%s0] sm:$0xff]
  %v22 = vld [vmem:[%s0 + $0x8] sm:$0xff]
  %v23 = vld [vmem:[%s1] sm:$0xff]
  %vm24 = vcmask 64512
  %v26 = vsel %vm24, %v21, 0
  %v29 = vsel %vm24, %v22, 0
  %31 = vmatprep.subr.mxu0 0.0
  %32 = vmatpush1.msra.mxu0 %v23
  %33 = vmatprep.subr.mxu0 0.0
  %34 = vmatpush1.msra.mxu0 0.0
  %35 = vmatprep.subr.mxu0 0.0
  %36 = vmatpush1.msra.mxu0 0.0
  %37 = vmatprep.subr.mxu0 0.0
  %38 = vmatpush1.msra.mxu0 0.0
  %39 = vmatprep.subr.mxu0 0.0
  %40 = vmatpush1.msra.mxu0 0.0
  %41 = vmatprep.subr.mxu0 0.0
  %42 = vmatpush1.msra.mxu0 0.0
  %43 = vmatprep.subr.mxu0 0.0
  %44 = vmatpush1.msra.mxu0 0.0
  %45 = vmatprep.subr.mxu0 0.0
  %46 = vmatpush1.msra.mxu0 0.0
  %47 = vmatprep.subr.mxu0 0.0
  %48 = vmatpush1.msra.mxu0 0.0
  %49 = vmatprep.subr.mxu0 0.0
  %50 = vmatpush1.msra.mxu0 0.0
  %51 = vmatprep.subr.mxu0 0.0
  %52 = vmatpush1.msra.mxu0 0.0
  %53 = vmatprep.subr.mxu0 0.0
  %54 = vmatpush1.msra.mxu0 0.0
  %55 = vmatprep.subr.mxu0 0.0
  %56 = vmatpush1.msra.mxu0 0.0
  %57 = vmatprep.subr.mxu0 0.0
  %58 = vmatpush1.msra.mxu0 0.0
  %59 = vmatprep.subr.mxu0 0.0
  %60 = vmatpush1.msra.mxu0 0.0
  %61 = vmatprep.subr.mxu0 0.0
  %62 = vmatpush1.msra.mxu0 0.0
  %63 = vmatprep.subr.mxu0 0.0
  %64 = vmatpush1.msra.mxu0 0.0
  %65 = vmatprep.subr.mxu0 0.0
  %66 = vmatpush1.msra.mxu0 0.0
  %67 = vmatprep.subr.mxu0 0.0
  %68 = vmatpush1.msra.mxu0 0.0
  %69 = vmatprep.subr.mxu0 0.0
  %70 = vmatpush1.msra.mxu0 0.0
  %71 = vmatprep.subr.mxu0 0.0
  %72 = vmatpush1.msra.mxu0 0.0
  %73 = vmatprep.subr.mxu0 0.0
  %74 = vmatpush1.msra.mxu0 0.0
  %75 = vmatprep.subr.mxu0 0.0
  %76 = vmatpush1.msra.mxu0 0.0
  %77 = vmatprep.subr.mxu0 0.0
  %78 = vmatpush1.msra.mxu0 0.0
  %79 = vmatprep.subr.mxu0 0.0
  %80 = vmatpush1.msra.mxu0 0.0
  %81 = vmatprep.subr.mxu0 0.0
  %82 = vmatpush1.msra.mxu0 0.0
  %83 = vmatprep.subr.mxu0 0.0
  %84 = vmatpush1.msra.mxu0 0.0
  %85 = vmatprep.subr.mxu0 0.0
  %86 = vmatpush1.msra.mxu0 0.0
  %87 = vmatprep.subr.mxu0 0.0
  %88 = vmatpush1.msra.mxu0 0.0
  %89 = vmatprep.subr.mxu0 0.0
  %90 = vmatpush1.msra.mxu0 0.0
  %91 = vmatprep.subr.mxu0 0.0
  %92 = vmatpush1.msra.mxu0 0.0
  %93 = vmatprep.subr.mxu0 0.0
  %94 = vmatpush1.msra.mxu0 0.0
  %95 = vmatprep.mubr.f32.mxu0 0.0
  %96 = vmatmul.mubr.f32.gmra.mrb[0].mxu0 %v26
  %v97 = vpop.f32.mrb[0].mxu0
  %v98 = vadd.f32 0.0, %v97
  %v99 = vpop.f32.mrb[0].mxu0
  %100 = vmatprep.mubr.f32.mxu0 0.0
  %101 = vmatmul.mubr.f32.gmra.mrb[0].mxu0 %v29
  %v102 = vpop.f32.mrb[0].mxu0
  %v103 = vadd.f32 0.0, %v102
  %v104 = vpop.f32.mrb[0].mxu0
  %105 = vdwg.mxu0
  %v106 = vld [vmem:[#allocation2] sm:$0xff]
  %v107 = vld [vmem:[#allocation2 + $0x8] sm:$0xff]
  %v108 = vadd.f32 %v106, %v98
  %v109 = vadd.f32 %v107, %v103
  %vm110 = vcmask 130048
  %111 = vst.msk [vmem:[#allocation2] sm:$0xff] %vm110, %v108
  %112 = vst.msk [vmem:[#allocation2 + $0x8] sm:$0xff] %vm110, %v109
  // Predicated region
  $region18: #{vbgae2_forward.12} parent=0 // pred_check
    %p113 = pneg %p14
  $region19: #{vbgae2_forward.12} parent=0 // pred_check_branch
    %115 = sbr.rel (%p113) target = $region21
  $region20: #{vbgae2_forward.12} parent=0 // pred_region
    %v116 = vld [vmem:[#allocation2] sm:$0xff]
    %v117 = vld [vmem:[#allocation2 + $0x8] sm:$0xff]
    %v118 = vmax.f32 %v116, 0.0
    %v119 = vmax.f32 %v117, 0.0
    %v120 = vld [vmem:[%s2] sm:$0xff]
    %v121 = vld [vmem:[%s2 + $0x8] sm:$0xff]
    %v123 = vsel %vm110, %v118, 0
    %v126 = vsel %vm110, %v119, 0
    %128 = vmatprep.subr.mxu0 0.0
    %129 = vmatpush1.msra.mxu0 %v120
    %130 = vmatprep.subr.mxu0 0.0
    %131 = vmatpush1.msra.mxu0 %v121
    %132 = vmatprep.subr.mxu0 0.0
    %133 = vmatpush1.msra.mxu0 0.0
    %134 = vmatprep.subr.mxu0 0.0
    %135 = vmatpush1.msra.mxu0 0.0
    %136 = vmatprep.subr.mxu0 0.0
    %137 = vmatpush1.msra.mxu0 0.0
    %138 = vmatprep.subr.mxu0 0.0
    %139 = vmatpush1.msra.mxu0 0.0
    %140 = vmatprep.subr.mxu0 0.0
    %141 = vmatpush1.msra.mxu0 0.0
    %142 = vmatprep.subr.mxu0 0.0
    %143 = vmatpush1.msra.mxu0 0.0
    %144 = vmatprep.subr.mxu0 0.0
    %145 = vmatpush1.msra.mxu0 0.0
    %146 = vmatprep.subr.mxu0 0.0
    %147 = vmatpush1.msra.mxu0 0.0
    %148 = vmatprep.subr.mxu0 0.0
    %149 = vmatpush1.msra.mxu0 0.0
    %150 = vmatprep.subr.mxu0 0.0
    %151 = vmatpush1.msra.mxu0 0.0
    %152 = vmatprep.subr.mxu0 0.0
    %153 = vmatpush1.msra.mxu0 0.0
    %154 = vmatprep.subr.mxu0 0.0
    %155 = vmatpush1.msra.mxu0 0.0
    %156 = vmatprep.subr.mxu0 0.0
    %157 = vmatpush1.msra.mxu0 0.0
    %158 = vmatprep.subr.mxu0 0.0
    %159 = vmatpush1.msra.mxu0 0.0
    %160 = vmatprep.subr.mxu0 0.0
    %161 = vmatpush1.msra.mxu0 0.0
    %162 = vmatprep.subr.mxu0 0.0
    %163 = vmatpush1.msra.mxu0 0.0
    %164 = vmatprep.subr.mxu0 0.0
    %165 = vmatpush1.msra.mxu0 0.0
    %166 = vmatprep.subr.mxu0 0.0
    %167 = vmatpush1.msra.mxu0 0.0
    %168 = vmatprep.subr.mxu0 0.0
    %169 = vmatpush1.msra.mxu0 0.0
    %170 = vmatprep.subr.mxu0 0.0
    %171 = vmatpush1.msra.mxu0 0.0
    %172 = vmatprep.subr.mxu0 0.0
    %173 = vmatpush1.msra.mxu0 0.0
    %174 = vmatprep.subr.mxu0 0.0
    %175 = vmatpush1.msra.mxu0 0.0
    %176 = vmatprep.subr.mxu0 0.0
    %177 = vmatpush1.msra.mxu0 0.0
    %178 = vmatprep.subr.mxu0 0.0
    %179 = vmatpush1.msra.mxu0 0.0
    %180 = vmatprep.subr.mxu0 0.0
    %181 = vmatpush1.msra.mxu0 0.0
    %182 = vmatprep.subr.mxu0 0.0
    %183 = vmatpush1.msra.mxu0 0.0
    %184 = vmatprep.subr.mxu0 0.0
    %185 = vmatpush1.msra.mxu0 0.0
    %186 = vmatprep.subr.mxu0 0.0
    %187 = vmatpush1.msra.mxu0 0.0
    %188 = vmatprep.subr.mxu0 0.0
    %189 = vmatpush1.msra.mxu0 0.0
    %190 = vmatprep.subr.mxu0 0.0
    %191 = vmatpush1.msra.mxu0 0.0
    %192 = vmatprep.mubr.f32.mxu0 0.0
    %193 = vmatmul.mubr.f32.gmra.mrb[0].mxu0 %v123
    %v194 = vpop.f32.mrb[0].mxu0
    %v195 = vadd.f32 0.0, %v194
    %v196 = vpop.f32.mrb[0].mxu0
    %197 = vmatprep.mubr.f32.mxu0 0.0
    %198 = vmatmul.mubr.f32.gmra.mrb[0].mxu0 %v126
    %v199 = vpop.f32.mrb[0].mxu0
    %v200 = vadd.f32 0.0, %v199
    %v201 = vpop.f32.mrb[0].mxu0
    %202 = vdwg.mxu0
    %203 = vst.msk [vmem:[%s3] sm:$0xff] %vm110, %v195
    %204 = vst.msk [vmem:[%s3 + $0x8] sm:$0xff] %vm110, %v200
  $region21: #{vbgae2_forward.12} parent=0 // pred_fallthru
    _
  // Predicated region
  $region22: #{vbgae2_forward.12} parent=0 // pred_check
    _
  $region23: #{vbgae2_forward.12} parent=0 // pred_check_branch
    %206 = sbr.rel (0) target = $region25
  $region24: #{vbgae2_forward.12} parent=0 // pred_region
    _
  $region25: #{vbgae2_forward.12} parent=0 // pred_fallthru
    _
  // Predicated region
  $region26: #{vbgae2_forward.12} parent=0 // pred_check
    _
  $region27: #{vbgae2_forward.12} parent=0 // pred_check_branch
    %208 = sbr.rel (0) target = $region29
  $region28: #{vbgae2_forward.12} parent=0 // pred_region
    _
  $region29: #{vbgae2_forward.12} parent=0 // pred_fallthru
    _

// kernel: vbgae2_forward.11
$region0: #{vbgae2_forward.11}
  #allocation0 [shape = 'u32[]', space=smem, size = 0x4, offset = 0x4, fixed_abs, tag = 'smem constant byte address 0x4 - core index']
  #allocation1 [shape = 'u32[144,128]{1,0:T(1,128)}', space=vmem, size = 0x12000, scoped, tag = 'internal scratch']
  %s0 = inlined_call_operand.vmem [shape: f32[8,8], index: 0, kind: input, shape index: {}]
  %s1 = inlined_call_operand.vmem [shape: f32[8,16], index: 1, kind: input, shape index: {}]
  %s2 = inlined_call_operand.vmem [shape: f32[8,16], index: 2, kind: output, shape index: {}]
  %s3 = sld [smem:[#allocation0]]
  $region18: #{vbgae2_forward.11} parent=0
    _
  %s5 = ssub.s32 1, %s3
  %s6 = scalar_select 0, %s5, %s3
  // Predicated region
  $region2: #{vbgae2_forward.11} parent=0 // pred_check
    _
  $region3: #{vbgae2_forward.11} parent=0 // pred_check_branch
    %8 = sbr.rel (0) target = $region5
  $region4: #{vbgae2_forward.11} parent=0 // pred_region
    _
  $region5: #{vbgae2_forward.11} parent=0 // pred_fallthru
    _
  // Predicated region
  $region6: #{vbgae2_forward.11} parent=0 // pred_check
    _
  $region7: #{vbgae2_forward.11} parent=0 // pred_check_branch
    %10 = sbr.rel (0) target = $region9
  $region8: #{vbgae2_forward.11} parent=0 // pred_region
    _
  $region9: #{vbgae2_forward.11} parent=0 // pred_fallthru
    _
  %v11 = vld [vmem:[%s0] sm:$0xff]
  %v12 = vld [vmem:[%s1] sm:$0xff]
  %vm13 = vcmask 64512
  %v15 = vsel %vm13, %v11, 0
  %17 = vmatprep.subr.mxu0 0.0
  %18 = vmatpush1.msra.mxu0 %v12
  %19 = vmatprep.subr.mxu0 0.0
  %20 = vmatpush1.msra.mxu0 0.0
  %21 = vmatprep.subr.mxu0 0.0
  %22 = vmatpush1.msra.mxu0 0.0
  %23 = vmatprep.subr.mxu0 0.0
  %24 = vmatpush1.msra.mxu0 0.0
  %25 = vmatprep.subr.mxu0 0.0
  %26 = vmatpush1.msra.mxu0 0.0
  %27 = vmatprep.subr.mxu0 0.0
  %28 = vmatpush1.msra.mxu0 0.0
  %29 = vmatprep.subr.mxu0 0.0
  %30 = vmatpush1.msra.mxu0 0.0
  %31 = vmatprep.subr.mxu0 0.0
  %32 = vmatpush1.msra.mxu0 0.0
  %33 = vmatprep.subr.mxu0 0.0
  %34 = vmatpush1.msra.mxu0 0.0
  %35 = vmatprep.subr.mxu0 0.0
  %36 = vmatpush1.msra.mxu0 0.0
  %37 = vmatprep.subr.mxu0 0.0
  %38 = vmatpush1.msra.mxu0 0.0
  %39 = vmatprep.subr.mxu0 0.0
  %40 = vmatpush1.msra.mxu0 0.0
  %41 = vmatprep.subr.mxu0 0.0
  %42 = vmatpush1.msra.mxu0 0.0
  %43 = vmatprep.subr.mxu0 0.0
  %44 = vmatpush1.msra.mxu0 0.0
  %45 = vmatprep.subr.mxu0 0.0
  %46 = vmatpush1.msra.mxu0 0.0
  %47 = vmatprep.subr.mxu0 0.0
  %48 = vmatpush1.msra.mxu0 0.0
  %49 = vmatprep.subr.mxu0 0.0
  %50 = vmatpush1.msra.mxu0 0.0
  %51 = vmatprep.subr.mxu0 0.0
  %52 = vmatpush1.msra.mxu0 0.0
  %53 = vmatprep.subr.mxu0 0.0
  %54 = vmatpush1.msra.mxu0 0.0
  %55 = vmatprep.subr.mxu0 0.0
  %56 = vmatpush1.msra.mxu0 0.0
  %57 = vmatprep.subr.mxu0 0.0
  %58 = vmatpush1.msra.mxu0 0.0
  %59 = vmatprep.subr.mxu0 0.0
  %60 = vmatpush1.msra.mxu0 0.0
  %61 = vmatprep.subr.mxu0 0.0
  %62 = vmatpush1.msra.mxu0 0.0
  %63 = vmatprep.subr.mxu0 0.0
  %64 = vmatpush1.msra.mxu0 0.0
  %65 = vmatprep.subr.mxu0 0.0
  %66 = vmatpush1.msra.mxu0 0.0
  %67 = vmatprep.subr.mxu0 0.0
  %68 = vmatpush1.msra.mxu0 0.0
  %69 = vmatprep.subr.mxu0 0.0
  %70 = vmatpush1.msra.mxu0 0.0
  %71 = vmatprep.subr.mxu0 0.0
  %72 = vmatpush1.msra.mxu0 0.0
  %73 = vmatprep.subr.mxu0 0.0
  %74 = vmatpush1.msra.mxu0 0.0
  %75 = vmatprep.subr.mxu0 0.0
  %76 = vmatpush1.msra.mxu0 0.0
  %77 = vmatprep.subr.mxu0 0.0
  %78 = vmatpush1.msra.mxu0 0.0
  %79 = vmatprep.subr.mxu0 0.0
  %80 = vmatpush1.msra.mxu0 0.0
  %81 = vmatprep.mubr.f32.mxu0 0.0
  %82 = vmatmul.mubr.f32.gmra.mrb[0].mxu0 %v15
  %v83 = vpop.f32.mrb[0].mxu0
  %v84 = vadd.f32 0.0, %v83
  %v85 = vpop.f32.mrb[0].mxu0
  %86 = vdwg.mxu0
  %vm87 = vcmask 130048
  %88 = vst.msk [vmem:[%s2] sm:$0xff] %vm87, %v84
  // Predicated region
  $region10: #{vbgae2_forward.11} parent=0 // pred_check
    _
  $region11: #{vbgae2_forward.11} parent=0 // pred_check_branch
    %90 = sbr.rel (0) target = $region13
  $region12: #{vbgae2_forward.11} parent=0 // pred_region
    _
  $region13: #{vbgae2_forward.11} parent=0 // pred_fallthru
    _
  // Predicated region
  $region14: #{vbgae2_forward.11} parent=0 // pred_check
    _
  $region15: #{vbgae2_forward.11} parent=0 // pred_check_branch
    %92 = sbr.rel (0) target = $region17
  $region16: #{vbgae2_forward.11} parent=0 // pred_region
    _
  $region17: #{vbgae2_forward.11} parent=0 // pred_fallthru
    _

// kernel: vbgae2_forward.15
$region0: #{vbgae2_forward.15}
  #allocation0 [shape = 'u32[]', space=smem, size = 0x4, offset = 0x4, fixed_abs, tag = 'smem constant byte address 0x4 - core index']
  #allocation1 [shape = 'u32[144,128]{1,0:T(1,128)}', space=vmem, size = 0x12000, scoped, tag = 'internal scratch']
  %s0 = inlined_call_operand.vmem [shape: f32[4,8], index: 0, kind: input, shape index: {}]
  %s1 = inlined_call_operand.vmem [shape: f32[8,8], index: 1, kind: input, shape index: {}]
  %s2 = inlined_call_operand.vmem [shape: f32[4,1], index: 2, kind: input, shape index: {}]
  %s3 = inlined_call_operand.vmem [shape: f32[1,8], index: 3, kind: input, shape index: {}]
  %s4 = inlined_call_operand.hbm [shape: f32[4,8], index: 4, kind: output, shape index: {}]
  %s5 = sld [smem:[#allocation0]]
  $region26: #{vbgae2_forward.15} parent=0
    _
  %s7 = ssub.s32 1, %s5
  %s8 = scalar_select 0, %s7, %s5
  $region1: #{vbgae2_forward.15} parent=0
    #allocation2 [shape = 'u8[2048]{0}', space=vmem, size = 0x800, scoped, tag = 'output window, operand 0, single buffered']
    #allocation3 [shape = 's32[1]{0}', space=sflag, size = 0x4, scoped, tag = 'scoped memory for vbgae2_forward.15']
    %9 = vsyncpa [#allocation3], 0
    // Predicated region
    $region2: #{vbgae2_forward.15} parent=1 // pred_check
      _
    $region3: #{vbgae2_forward.15} parent=1 // pred_check_branch
      %11 = sbr.rel (0) target = $region5
    $region4: #{vbgae2_forward.15} parent=1 // pred_region
      _
    $region5: #{vbgae2_forward.15} parent=1 // pred_fallthru
      _
    // Predicated region
    $region6: #{vbgae2_forward.15} parent=1 // pred_check
      _
    $region7: #{vbgae2_forward.15} parent=1 // pred_check_branch
      %13 = sbr.rel (0) target = $region9
    $region8: #{vbgae2_forward.15} parent=1 // pred_region
      _
    $region9: #{vbgae2_forward.15} parent=1 // pred_fallthru
      _
    // Predicated region
    $region10: #{vbgae2_forward.15} parent=1 // pred_check
      _
    $region11: #{vbgae2_forward.15} parent=1 // pred_check_branch
      %15 = sbr.rel (0) target = $region13
    $region12: #{vbgae2_forward.15} parent=1 // pred_region
      _
    $region13: #{vbgae2_forward.15} parent=1 // pred_fallthru
      _
    // Predicated region
    $region14: #{vbgae2_forward.15} parent=1 // pred_check
      _
    $region15: #{vbgae2_forward.15} parent=1 // pred_check_branch
      %17 = sbr.rel (0) target = $region17
    $region16: #{vbgae2_forward.15} parent=1 // pred_region
      _
    $region17: #{vbgae2_forward.15} parent=1 // pred_fallthru
      _
    %s18 = smul.u32 0, 8
    %s19 = scalar_lea.vmem %s1, %s18
    %v20 = vld [vmem:[%s19] sm:$0xff]
    %v21 = vld [vmem:[%s0] sm:$0xf]
    %vm22 = vcmask 64512
    %v24 = vsel %vm22, %v21, 0
    %v27 = vsel %vm22, %v20, 0
    %29 = vmatprep.subr.mxu0 0.0
    %30 = vmatpush1.xpose.msra.mxu0 %v27
    %31 = vmatprep.subr.mxu0 0.0
    %32 = vmatpush1.xpose.msra.mxu0 0.0
    %33 = vmatprep.subr.mxu0 0.0
    %34 = vmatpush1.xpose.msra.mxu0 0.0
    %35 = vmatprep.subr.mxu0 0.0
    %36 = vmatpush1.xpose.msra.mxu0 0.0
    %37 = vmatprep.subr.mxu0 0.0
    %38 = vmatpush1.xpose.msra.mxu0 0.0
    %39 = vmatprep.subr.mxu0 0.0
    %40 = vmatpush1.xpose.msra.mxu0 0.0
    %41 = vmatprep.subr.mxu0 0.0
    %42 = vmatpush1.xpose.msra.mxu0 0.0
    %43 = vmatprep.subr.mxu0 0.0
    %44 = vmatpush1.xpose.msra.mxu0 0.0
    %45 = vmatprep.subr.mxu0 0.0
    %46 = vmatpush1.xpose.msra.mxu0 0.0
    %47 = vmatprep.subr.mxu0 0.0
    %48 = vmatpush1.xpose.msra.mxu0 0.0
    %49 = vmatprep.subr.mxu0 0.0
    %50 = vmatpush1.xpose.msra.mxu0 0.0
    %51 = vmatprep.subr.mxu0 0.0
    %52 = vmatpush1.xpose.msra.mxu0 0.0
    %53 = vmatprep.subr.mxu0 0.0
    %54 = vmatpush1.xpose.msra.mxu0 0.0
    %55 = vmatprep.subr.mxu0 0.0
    %56 = vmatpush1.xpose.msra.mxu0 0.0
    %57 = vmatprep.subr.mxu0 0.0
    %58 = vmatpush1.xpose.msra.mxu0 0.0
    %59 = vmatprep.subr.mxu0 0.0
    %60 = vmatpush1.xpose.msra.mxu0 0.0
    %61 = vmatprep.subr.mxu0 0.0
    %62 = vmatpush1.xpose.msra.mxu0 0.0
    %63 = vmatprep.subr.mxu0 0.0
    %64 = vmatpush1.xpose.msra.mxu0 0.0
    %65 = vmatprep.subr.mxu0 0.0
    %66 = vmatpush1.xpose.msra.mxu0 0.0
    %67 = vmatprep.subr.mxu0 0.0
    %68 = vmatpush1.xpose.msra.mxu0 0.0
    %69 = vmatprep.subr.mxu0 0.0
    %70 = vmatpush1.xpose.msra.mxu0 0.0
    %71 = vmatprep.subr.mxu0 0.0
    %72 = vmatpush1.xpose.msra.mxu0 0.0
    %73 = vmatprep.subr.mxu0 0.0
    %74 = vmatpush1.xpose.msra.mxu0 0.0
    %75 = vmatprep.subr.mxu0 0.0
    %76 = vmatpush1.xpose.msra.mxu0 0.0
    %77 = vmatprep.subr.mxu0 0.0
    %78 = vmatpush1.xpose.msra.mxu0 0.0
    %79 = vmatprep.subr.mxu0 0.0
    %80 = vmatpush1.xpose.msra.mxu0 0.0
    %81 = vmatprep.subr.mxu0 0.0
    %82 = vmatpush1.xpose.msra.mxu0 0.0
    %83 = vmatprep.subr.mxu0 0.0
    %84 = vmatpush1.xpose.msra.mxu0 0.0
    %85 = vmatprep.subr.mxu0 0.0
    %86 = vmatpush1.xpose.msra.mxu0 0.0
    %87 = vmatprep.subr.mxu0 0.0
    %88 = vmatpush1.xpose.msra.mxu0 0.0
    %89 = vmatprep.subr.mxu0 0.0
    %90 = vmatpush1.xpose.msra.mxu0 0.0
    %91 = vmatprep.subr.mxu0 0.0
    %92 = vmatpush1.xpose.msra.mxu0 0.0
    %93 = vmatprep.mubr.f32.mxu0 0.0
    %94 = vmatmul.mubr.f32.gmra.mrb[0].mxu0 %v24
    %v95 = vpop.f32.mrb[0].mxu0
    %v96 = vadd.f32 0.0, %v95
    %v97 = vpop.f32.mrb[0].mxu0
    %98 = vdwg.mxu0
    %v99 = vld [vmem:[%s2] sm:$0xf]
    %v100 = vld [vmem:[%s3] sm:$0x1]
    %102 = vset.pattern.permute.xlu0 0
    %103 = vperm.xlu0 %102, %v99
    %v104 = vpop.permute.xlu0 %103
    %v107 = vlaneseq
    %v108 = vshrl.u32 %v107, 7
    %v109 = vsub.s32 0, %v108
    %v110 = vrot.slane %v100, %v109
    %v112 = vadd.f32 %v104, %v110
    %v113 = vmul.f32 %v96, 2.0
    %v114 = vsub.f32 %v112, %v113
    %v115 = vmax.f32 %v114, 0.0
    %v116 = vmul.f32 %v115, -0.5
    %v117 = vmul.f32 %v116, 1.442695
    %v118 = vpow.pop %v117
    %vm119 = vcmask 60416
    %120 = vst.msk [vmem:[#allocation2] sm:$0xf] %vm119, %v118
    // Predicated region
    $region18: #{vbgae2_forward.15} parent=1 // pred_check
      _
    $region19: #{vbgae2_forward.15} parent=1 // pred_check_branch
      %122 = sbr.rel (0) target = $region21
    $region20: #{vbgae2_forward.15} parent=1 // pred_region
      %s124 = ssub.s32 64, 64
      %125 = vsyncadd [#allocation3], %s124
      %s127 = sshll.u32 [#allocation2], 4
      %s128 = int_to_ptr.vmem [resolvable:$true] %s127
      %130 = dma.vmem_to_hbm [thread:$0]  %s128, 64, %s4, [#allocation3]
    $region21: #{vbgae2_forward.15} parent=1 // pred_fallthru
      _
    // Predicated region
    $region22: #{vbgae2_forward.15} parent=1 // pred_check
      _
    $region23: #{vbgae2_forward.15} parent=1 // pred_check_branch
      %132 = sbr.rel (0) target = $region25
    $region24: #{vbgae2_forward.15} parent=1 // pred_region
      %133 = dma.done [#allocation3], 64
    $region25: #{vbgae2_forward.15} parent=1 // pred_fallthru
      _
    %134 = vsyncpa [#allocation3], 1

// kernel: vbgae2_forward.14
$region0: #{vbgae2_forward.14}
  #allocation0 [shape = 'u32[]', space=smem, size = 0x4, offset = 0x4, fixed_abs, tag = 'smem constant byte address 0x4 - core index']
  #allocation1 [shape = 'u32[144,128]{1,0:T(1,128)}', space=vmem, size = 0x12000, scoped, tag = 'internal scratch']
  %s0 = inlined_call_operand.vmem [shape: f32[16,8], index: 0, kind: input, shape index: {}]
  %s1 = inlined_call_operand.vmem [shape: f32[8,8], index: 1, kind: input, shape index: {}]
  %s2 = inlined_call_operand.vmem [shape: f32[16,1], index: 2, kind: input, shape index: {}]
  %s3 = inlined_call_operand.vmem [shape: f32[1,8], index: 3, kind: input, shape index: {}]
  %s4 = inlined_call_operand.vmem [shape: f32[16,8], index: 4, kind: output, shape index: {}]
  %s5 = sld [smem:[#allocation0]]
  $region26: #{vbgae2_forward.14} parent=0
    _
  %s7 = ssub.s32 1, %s5
  %s8 = scalar_select 0, %s7, %s5
  // Predicated region
  $region2: #{vbgae2_forward.14} parent=0 // pred_check
    _
  $region3: #{vbgae2_forward.14} parent=0 // pred_check_branch
    %10 = sbr.rel (0) target = $region5
  $region4: #{vbgae2_forward.14} parent=0 // pred_region
    _
  $region5: #{vbgae2_forward.14} parent=0 // pred_fallthru
    _
  // Predicated region
  $region6: #{vbgae2_forward.14} parent=0 // pred_check
    _
  $region7: #{vbgae2_forward.14} parent=0 // pred_check_branch
    %12 = sbr.rel (0) target = $region9
  $region8: #{vbgae2_forward.14} parent=0 // pred_region
    _
  $region9: #{vbgae2_forward.14} parent=0 // pred_fallthru
    _
  // Predicated region
  $region10: #{vbgae2_forward.14} parent=0 // pred_check
    _
  $region11: #{vbgae2_forward.14} parent=0 // pred_check_branch
    %14 = sbr.rel (0) target = $region13
  $region12: #{vbgae2_forward.14} parent=0 // pred_region
    _
  $region13: #{vbgae2_forward.14} parent=0 // pred_fallthru
    _
  // Predicated region
  $region14: #{vbgae2_forward.14} parent=0 // pred_check
    _
  $region15: #{vbgae2_forward.14} parent=0 // pred_check_branch
    %16 = sbr.rel (0) target = $region17
  $region16: #{vbgae2_forward.14} parent=0 // pred_region
    _
  $region17: #{vbgae2_forward.14} parent=0 // pred_fallthru
    _
  %s17 = smul.u32 0, 8
  %s18 = scalar_lea.vmem %s1, %s17
  %v19 = vld [vmem:[%s18] sm:$0xff]
  %v20 = vld [vmem:[%s0] sm:$0xff]
  %v21 = vld [vmem:[%s0 + $0x8] sm:$0xff]
  %vm22 = vcmask 64512
  %v24 = vsel %vm22, %v20, 0
  %v27 = vsel %vm22, %v21, 0
  %v30 = vsel %vm22, %v19, 0
  %32 = vmatprep.subr.mxu0 0.0
  %33 = vmatpush1.xpose.msra.mxu0 %v30
  %34 = vmatprep.subr.mxu0 0.0
  %35 = vmatpush1.xpose.msra.mxu0 0.0
  %36 = vmatprep.subr.mxu0 0.0
  %37 = vmatpush1.xpose.msra.mxu0 0.0
  %38 = vmatprep.subr.mxu0 0.0
  %39 = vmatpush1.xpose.msra.mxu0 0.0
  %40 = vmatprep.subr.mxu0 0.0
  %41 = vmatpush1.xpose.msra.mxu0 0.0
  %42 = vmatprep.subr.mxu0 0.0
  %43 = vmatpush1.xpose.msra.mxu0 0.0
  %44 = vmatprep.subr.mxu0 0.0
  %45 = vmatpush1.xpose.msra.mxu0 0.0
  %46 = vmatprep.subr.mxu0 0.0
  %47 = vmatpush1.xpose.msra.mxu0 0.0
  %48 = vmatprep.subr.mxu0 0.0
  %49 = vmatpush1.xpose.msra.mxu0 0.0
  %50 = vmatprep.subr.mxu0 0.0
  %51 = vmatpush1.xpose.msra.mxu0 0.0
  %52 = vmatprep.subr.mxu0 0.0
  %53 = vmatpush1.xpose.msra.mxu0 0.0
  %54 = vmatprep.subr.mxu0 0.0
  %55 = vmatpush1.xpose.msra.mxu0 0.0
  %56 = vmatprep.subr.mxu0 0.0
  %57 = vmatpush1.xpose.msra.mxu0 0.0
  %58 = vmatprep.subr.mxu0 0.0
  %59 = vmatpush1.xpose.msra.mxu0 0.0
  %60 = vmatprep.subr.mxu0 0.0
  %61 = vmatpush1.xpose.msra.mxu0 0.0
  %62 = vmatprep.subr.mxu0 0.0
  %63 = vmatpush1.xpose.msra.mxu0 0.0
  %64 = vmatprep.subr.mxu0 0.0
  %65 = vmatpush1.xpose.msra.mxu0 0.0
  %66 = vmatprep.subr.mxu0 0.0
  %67 = vmatpush1.xpose.msra.mxu0 0.0
  %68 = vmatprep.subr.mxu0 0.0
  %69 = vmatpush1.xpose.msra.mxu0 0.0
  %70 = vmatprep.subr.mxu0 0.0
  %71 = vmatpush1.xpose.msra.mxu0 0.0
  %72 = vmatprep.subr.mxu0 0.0
  %73 = vmatpush1.xpose.msra.mxu0 0.0
  %74 = vmatprep.subr.mxu0 0.0
  %75 = vmatpush1.xpose.msra.mxu0 0.0
  %76 = vmatprep.subr.mxu0 0.0
  %77 = vmatpush1.xpose.msra.mxu0 0.0
  %78 = vmatprep.subr.mxu0 0.0
  %79 = vmatpush1.xpose.msra.mxu0 0.0
  %80 = vmatprep.subr.mxu0 0.0
  %81 = vmatpush1.xpose.msra.mxu0 0.0
  %82 = vmatprep.subr.mxu0 0.0
  %83 = vmatpush1.xpose.msra.mxu0 0.0
  %84 = vmatprep.subr.mxu0 0.0
  %85 = vmatpush1.xpose.msra.mxu0 0.0
  %86 = vmatprep.subr.mxu0 0.0
  %87 = vmatpush1.xpose.msra.mxu0 0.0
  %88 = vmatprep.subr.mxu0 0.0
  %89 = vmatpush1.xpose.msra.mxu0 0.0
  %90 = vmatprep.subr.mxu0 0.0
  %91 = vmatpush1.xpose.msra.mxu0 0.0
  %92 = vmatprep.subr.mxu0 0.0
  %93 = vmatpush1.xpose.msra.mxu0 0.0
  %94 = vmatprep.subr.mxu0 0.0
  %95 = vmatpush1.xpose.msra.mxu0 0.0
  %96 = vmatprep.mubr.f32.mxu0 0.0
  %97 = vmatmul.mubr.f32.gmra.mrb[0].mxu0 %v24
  %v98 = vpop.f32.mrb[0].mxu0
  %v99 = vadd.f32 0.0, %v98
  %v100 = vpop.f32.mrb[0].mxu0
  %101 = vmatprep.mubr.f32.mxu0 0.0
  %102 = vmatmul.mubr.f32.gmra.mrb[0].mxu0 %v27
  %v103 = vpop.f32.mrb[0].mxu0
  %v104 = vadd.f32 0.0, %v103
  %v105 = vpop.f32.mrb[0].mxu0
  %106 = vdwg.mxu0
  %v107 = vld [vmem:[%s2] sm:$0xff]
  %v108 = vld [vmem:[%s2 + $0x8] sm:$0xff]
  %v109 = vld [vmem:[%s3] sm:$0x1]
  %111 = vset.pattern.permute.xlu0 0
  %112 = vperm.xlu0 %111, %v107
  %v113 = vpop.permute.xlu0 %112
  %116 = vset.pattern.permute.xlu0 0
  %117 = vperm.xlu0 %116, %v108
  %v118 = vpop.permute.xlu0 %117
  %v121 = vlaneseq
  %v122 = vshrl.u32 %v121, 7
  %v123 = vsub.s32 0, %v122
  %v124 = vrot.slane %v109, %v123
  %v126 = vadd.f32 %v113, %v124
  %v127 = vadd.f32 %v118, %v124
  %v128 = vmul.f32 %v99, 2.0
  %v129 = vmul.f32 %v104, 2.0
  %v130 = vsub.f32 %v126, %v128
  %v131 = vsub.f32 %v127, %v129
  %v132 = vmax.f32 %v130, 0.0
  %v133 = vmax.f32 %v131, 0.0
  %v134 = vmul.f32 %v132, -0.5
  %v135 = vmul.f32 %v133, -0.5
  %v136 = vmul.f32 %v134, 1.442695
  %v137 = vpow.pop %v136
  %v138 = vmul.f32 %v135, 1.442695
  %v139 = vpow.pop %v138
  %140 = vst.msk [vmem:[%s4] sm:$0xff] %vm22, %v137
  %141 = vst.msk [vmem:[%s4 + $0x8] sm:$0xff] %vm22, %v139
  // Predicated region
  $region18: #{vbgae2_forward.14} parent=0 // pred_check
    _
  $region19: #{vbgae2_forward.14} parent=0 // pred_check_branch
    %143 = sbr.rel (0) target = $region21
  $region20: #{vbgae2_forward.14} parent=0 // pred_region
    _
  $region21: #{vbgae2_forward.14} parent=0 // pred_fallthru
    _
  // Predicated region
  $region22: #{vbgae2_forward.14} parent=0 // pred_check
    _
  $region23: #{vbgae2_forward.14} parent=0 // pred_check_branch
    %145 = sbr.rel (0) target = $region25
  $region24: #{vbgae2_forward.14} parent=0 // pred_region
    _
  $region25: #{vbgae2_forward.14} parent=0 // pred_fallthru
    _

</llo_original>
